<compile_context>
chip_gen: v7x
topology: tpu7x:2x2x1
jax: 0.10.0
libtpu: 0.0.40
codegen_flags: <defaults>
</compile_context>

<pallas_src>
import functools

import numpy as np
import jax
import jax.numpy as jnp
from jax import lax
from jax.experimental import pallas as pl
from jax.experimental.pallas import tpu as pltpu


def _round_up(x, m):
    return ((x + m - 1) // m) * m


# ------------------------- Pallas kernel -------------------------

def rnn_layers_kernel(x_ref, m_ref, wih_ref, whh_ref, bg_ref, wp_ref, bp_ref,
                      out_ref, h_st, c_st, xg_sc, hall_sc,
                      *, T_c, B_c, Hp, unroll):
    """One (batch-chunk, time-chunk) step of LSTM + projection.

    x_ref   : (T_c, B_c, Dp)   bf16 time-major activations
    m_ref   : (T_c, B_c, 1)    f32 non-pad mask
    wih_ref : (Dp, 4*Hp)       bf16 input weights, gate order i|f|o|g
    whh_ref : (Hp, 4*Hp)       f32 recurrent weights, same gate order
    bg_ref  : (1, 4*Hp)        f32 folded bias (b_ih + b_hh)
    wp_ref  : (Hp, d_pad)      bf16 projection weight (lane-dense padded)
    bp_ref  : (1, d_pad)       f32 projection bias
    out_ref : (T_c, B_c, d_pad) f32 output tile
    h_st/c_st : (B_c, Hp) f32  LSTM state carried across time chunks
    xg_sc   : (T_c, B_c, 4*Hp) f32 scratch: per-chunk input-gate contributions
    hall_sc : (T_c, B_c, Hp)   bf16 scratch: masked hidden states of the chunk
    """
    # Reset carried LSTM state at the first time-chunk of every batch-chunk.
    @pl.when(pl.program_id(1) == 0)
    def _():
        h_st[...] = jnp.zeros_like(h_st)
        c_st[...] = jnp.zeros_like(c_st)

    # (1) Input-gate contribution for the whole chunk: ONE bf16 MXU matmul,
    #     bias folded in here (off the serial critical path), result parked in
    #     VMEM scratch so the loop only ever loads one (B_c, 4*Hp) slice.
    x2 = x_ref[...].reshape(T_c * B_c, -1)
    xg = jnp.dot(x2, wih_ref[...], preferred_element_type=jnp.float32) + bg_ref[...]
    xg_sc[...] = xg.reshape(T_c, B_c, 4 * Hp)

    # (2) Serial recurrence over the chunk's timesteps.
    w_hh = whh_ref[...]                       # hoisted; reused every step

    def step(t, carry):
        h, c = carry
        z = xg_sc[t] + jnp.dot(h, w_hh, preferred_element_type=jnp.float32)
        s = jax.nn.sigmoid(z[:, :3 * Hp])     # i|f|o gates: one EUP launch
        i_g = s[:, :Hp]
        f_g = s[:, Hp:2 * Hp]
        o_g = s[:, 2 * Hp:3 * Hp]
        g_g = jnp.tanh(z[:, 3 * Hp:])
        c = f_g * c + i_g * g_g
        h = o_g * jnp.tanh(c)
        # pad_packed_sequence semantics: padded steps contribute zero rows.
        # jnp.where (not multiply) so NaN/Inf in padded inputs cannot leak.
        hall_sc[t] = jnp.where(m_ref[t] > 0.0, h, 0.0).astype(hall_sc.dtype)
        return h, c

    h, c = lax.fori_loop(0, T_c, step, (h_st[...], c_st[...]), unroll=unroll)
    h_st[...] = h
    c_st[...] = c

    # (3) Projection of the whole chunk: ONE lane-dense bf16 MXU matmul.
    h_all = hall_sc[...].reshape(T_c * B_c, Hp)
    out = jnp.dot(h_all, wp_ref[...], preferred_element_type=jnp.float32) + bp_ref[...]
    out_ref[...] = out.reshape(T_c, B_c, -1).astype(out_ref.dtype)


# ------------------------- chunk sizing -------------------------

def _choose_time_chunk(L, B_c, Dp, Hp, d_pad, budget_bytes=12 * 1024 * 1024):
    """Largest multiple-of-8 time chunk whose per-chunk buffers fit the budget
    (budget chosen so double-buffered tiles + scratch stay far below v7x's
    64 MiB VMEM)."""
    per_t = B_c * (2 * Dp * 2        # x tile (bf16), double-buffered
                   + 2 * 4           # mask tile (f32), double-buffered
                   + 4 * Hp * 4      # xg scratch (f32)
                   + Hp * 2          # hall scratch (bf16)
                   + 2 * d_pad * 4)  # out tile (f32), double-buffered
    T_c = (budget_bytes // per_t) // 8 * 8
    T_c = max(8, min(T_c, _round_up(L, 8)))
    return int(T_c)


def _vmem_bytes(T_c, B_c, Dp, Hp, d_pad):
    tile_in = 2 * T_c * B_c * (Dp * 2 + 4)
    tile_out = 2 * T_c * B_c * d_pad * 4
    weights = 2 * (Dp * 4 * Hp * 2 + Hp * 4 * Hp * 4 + 4 * Hp * 4
                   + Hp * d_pad * 2 + d_pad * 4)
    scratch = 2 * B_c * Hp * 4 + T_c * B_c * (4 * Hp * 4 + Hp * 2)
    return tile_in + tile_out + weights + scratch


# ------------------------- wrapper -------------------------

def rnn_layers_forward(kparams, data, non_pad_mask):
    """JAX/Pallas equivalent of RNN_layers.forward (eval mode)."""
    B, L, D = data.shape
    assert D == kparams['d_model']
    Dp, Hp, d_pad = kparams['Dp'], kparams['Hp'], kparams['d_pad']

    # chunk geometry: batch padded to sublane multiple, time to 8-row multiples
    B_c = min(_round_up(B, 8), 128)
    Bp = _round_up(B, B_c)
    T_c = _choose_time_chunk(L, B_c, Dp, Hp, d_pad)
    Lp = _round_up(L, T_c)

    # one-time layout prep: zero-pad + time-major transpose + bf16 activations
    x = jnp.zeros((Lp, Bp, Dp), jnp.bfloat16)
    x = x.at[:L, :B, :D].set(jnp.transpose(data, (1, 0, 2)).astype(jnp.bfloat16))
    m = jnp.zeros((Lp, Bp, 1), jnp.float32)
    m = m.at[:L, :B, :].set(jnp.transpose(non_pad_mask.astype(jnp.float32),
                                          (1, 0, 2)))

    weights = [kparams['w_ih'], kparams['w_hh'], kparams['b_g'],
               kparams['w_proj'], kparams['b_proj']]

    def tiled(last):
        return pl.BlockSpec((T_c, B_c, last), lambda i, j: (j, i, 0))

    def full(w):
        nd = w.ndim
        return pl.BlockSpec(w.shape, lambda i, j, _nd=nd: (0,) * _nd)

    grid = (Bp // B_c, Lp // T_c)
    vmem_limit = int(min(max(2 * _vmem_bytes(T_c, B_c, Dp, Hp, d_pad),
                             16 * 2**20), 64 * 2**20))

    kernel = functools.partial(rnn_layers_kernel, T_c=T_c, B_c=B_c, Hp=Hp,
                               unroll=min(T_c, 8))
    out3 = pl.pallas_call(
        kernel,
        out_shape=jax.ShapeDtypeStruct((Lp, Bp, d_pad), jnp.float32),
        grid_spec=pltpu.PrefetchScalarGridSpec(
            num_scalar_prefetch=0,
            grid=grid,
            in_specs=[tiled(Dp), tiled(1)] + [full(w) for w in weights],
            out_specs=tiled(d_pad),
            scratch_shapes=[
                pltpu.VMEM((B_c, Hp), jnp.float32),            # h carry
                pltpu.VMEM((B_c, Hp), jnp.float32),            # c carry
                pltpu.VMEM((T_c, B_c, 4 * Hp), jnp.float32),   # xg chunk
                pltpu.VMEM((T_c, B_c, Hp), jnp.bfloat16),      # hall chunk
            ]),
        compiler_params=pltpu.CompilerParams(
            dimension_semantics=("parallel", "arbitrary"),
            vmem_limit_bytes=vmem_limit),
    )(x, m, *weights)

    # drop padding, back to (B, L, d_model)
    # TODO(synk): PyTorch's pad_packed_sequence truncates the time axis to
    # max(lengths); we always return the full L positions (identical whenever
    # at least one sequence has full length, as in the test below).
    return jnp.transpose(out3[:L, :B, :D], (1, 0, 2))


# ------------------------- parameter init / prep -------------------------

def init_params(key, d_model, d_rnn):
    """Canonical (PyTorch-style) parameters; gate order i|f|g|o, weights stored
    (in_features, out_features)."""
    ks = jax.random.split(key, 6)
    s = 1.0 / np.sqrt(d_rnn)
    u = lambda k, shape: jax.random.uniform(k, shape, jnp.float32, -s, s)
    return dict(w_ih=u(ks[0], (d_model, 4 * d_rnn)),
                w_hh=u(ks[1], (d_rnn, 4 * d_rnn)),
                b_ih=u(ks[2], (1, 4 * d_rnn)),
                b_hh=u(ks[3], (1, 4 * d_rnn)),
                w_proj=u(ks[4], (d_rnn, d_model)),
                b_proj=u(ks[5], (1, d_model)))


def prepare_kernel_params(params, d_model, d_rnn):
    """One-time weight prep: fold biases, reorder gates to i|f|o|g, zero-pad
    d_model/d_rnn to lane multiples, cast the big matmul operands to bf16."""
    D, H = d_model, d_rnn
    Dp, Hp, d_pad = _round_up(D, 128), _round_up(H, 128), _round_up(D, 128)
    order = (0, 1, 3, 2)   # new gate slots (i, f, o, g) <- old (i, f, g, o)

    def regate(w, rows, rows_pad):
        w = np.asarray(w)
        out = np.zeros((rows_pad, 4 * Hp), np.float32)
        for new_k, old_k in enumerate(order):
            out[:rows, new_k * Hp:new_k * Hp + H] = w[:, old_k * H:(old_k + 1) * H]
        return out

    b = np.asarray(params['b_ih'] + params['b_hh'])
    b_g = np.zeros((1, 4 * Hp), np.float32)
    for new_k, old_k in enumerate(order):
        b_g[:, new_k * Hp:new_k * Hp + H] = b[:, old_k * H:(old_k + 1) * H]

    w_p = np.zeros((Hp, d_pad), np.float32)
    w_p[:H, :D] = np.asarray(params['w_proj'])
    b_p = np.zeros((1, d_pad), np.float32)
    b_p[:, :D] = np.asarray(params['b_proj'])

    return dict(w_ih=jnp.asarray(regate(params['w_ih'], D, Dp), jnp.bfloat16),
                w_hh=jnp.asarray(regate(params['w_hh'], H, Hp), jnp.float32),
                b_g=jnp.asarray(b_g),
                w_proj=jnp.asarray(w_p, jnp.bfloat16),
                b_proj=jnp.asarray(b_p),
                d_model=D, d_rnn=H, Dp=Dp, Hp=Hp, d_pad=d_pad)


# ------------------------- plain-JAX reference -------------------------

def _ref_rnn_layers(params, data, non_pad_mask):
    B, L, D = data.shape
    H = params['w_hh'].shape[0]
    w_ih, w_hh = params['w_ih'], params['w_hh']
    b_g = params['b_ih'] + params['b_hh']

    def cell(carry, inp):
        h, c = carry
        xt, mt = inp                                   # (B, D), (B, 1)
        z = xt @ w_ih + h @ w_hh + b_g
        i_g = jax.nn.sigmoid(z[:, 0 * H:1 * H])
        f_g = jax.nn.sigmoid(z[:, 1 * H:2 * H])
        g_g = jnp.tanh(z[:, 2 * H:3 * H])
        o_g = jax.nn.sigmoid(z[:, 3 * H:4 * H])
        c = f_g * c + i_g * g_g
        h = o_g * jnp.tanh(c)
        return (h, c), h * mt                          # packed->padded: zero pads

    xs = jnp.transpose(data, (1, 0, 2))
    ms = jnp.transpose(non_pad_mask.astype(jnp.float32), (1, 0, 2))
    init = (jnp.zeros((B, H), jnp.float32), jnp.zeros((B, H), jnp.float32))
    _, hs = jax.lax.scan(cell, init, (xs, ms))
    hs = jnp.transpose(hs, (1, 0, 2))                  # (B, L, H)
    return hs @ params['w_proj'] + params['b_proj']


# ------------------------- main -------------------------

if __name__ == "__main__":
    d_model, d_rnn = 32, 32
    B, L = 2, 8

    key = jax.random.PRNGKey(0)
    k_param, k_data = jax.random.split(key)
    params = init_params(k_param, d_model, d_rnn)
    kparams = prepare_kernel_params(params, d_model, d_rnn)

    # trailing padding; one sequence has full length so pad_packed_sequence's
    # output length equals L
    lengths = jnp.array([8, 5], dtype=jnp.int32)
    pos = jnp.arange(L, dtype=jnp.int32)[None, :]
    non_pad_mask = (pos < lengths[:, None]).astype(jnp.float32)[:, :, None]  # (B,L,1)
    data = jax.random.normal(k_data, (B, L, d_model), jnp.float32) * non_pad_mask

    out = jax.block_until_ready(rnn_layers_forward(kparams, data, non_pad_mask))
    ref = jax.block_until_ready(_ref_rnn_layers(params, data, non_pad_mask))

    # tolerance loosened to account for bf16 operands in the two big matmuls
    np.testing.assert_allclose(np.asarray(out), np.asarray(ref),
                               rtol=3e-2, atol=3e-2)

    print("KERNEL_OK")
</pallas_src>

<mosaic_0001>
module attributes {stable_mosaic.version = 11 : i64} {
  func.func @rnn_layers_kernel(%arg0: i32, %arg1: i32, %arg2: memref<8x8x128xbf16, #tpu.memory_space<vmem>>, %arg3: memref<8x8x1xf32, #tpu.memory_space<vmem>>, %arg4: memref<128x512xbf16, #tpu.memory_space<vmem>>, %arg5: memref<128x512xf32, #tpu.memory_space<vmem>>, %arg6: memref<1x512xf32, #tpu.memory_space<vmem>>, %arg7: memref<128x128xbf16, #tpu.memory_space<vmem>>, %arg8: memref<1x128xf32, #tpu.memory_space<vmem>>, %arg9: memref<8x8x128xf32, #tpu.memory_space<vmem>>, %arg10: memref<8x128xf32, #tpu.memory_space<vmem>>, %arg11: memref<8x128xf32, #tpu.memory_space<vmem>>, %arg12: memref<8x8x512xf32, #tpu.memory_space<vmem>>, %arg13: memref<8x8x128xbf16, #tpu.memory_space<vmem>>) attributes {dimension_semantics = [#tpu.dimension_semantics<parallel>, #tpu.dimension_semantics<arbitrary>], iteration_bounds = array<i64: 1, 1>, scalar_prefetch = 0 : i64, scratch_operands = 4 : i64, tpu.core_type = #tpu.core_type<tc>, window_params = [{transform_indices = @transform_0, window_bounds = array<i64: 8, 8, 128>}, {transform_indices = @transform_1, window_bounds = array<i64: 8, 8, 1>}, {pipeline_mode = #tpu.pipeline_mode<synchronous>, transform_indices = @transform_2, window_bounds = array<i64: 128, 512>}, {pipeline_mode = #tpu.pipeline_mode<synchronous>, transform_indices = @transform_3, window_bounds = array<i64: 128, 512>}, {pipeline_mode = #tpu.pipeline_mode<synchronous>, transform_indices = @transform_4, window_bounds = array<i64: 1, 512>}, {pipeline_mode = #tpu.pipeline_mode<synchronous>, transform_indices = @transform_5, window_bounds = array<i64: 128, 128>}, {pipeline_mode = #tpu.pipeline_mode<synchronous>, transform_indices = @transform_6, window_bounds = array<i64: 1, 128>}, {transform_indices = @transform_7, window_bounds = array<i64: 8, 8, 128>}]} {
    %c0_i32 = arith.constant 0 : i32
    %0 = arith.cmpi eq, %arg1, %c0_i32 : i32
    %1 = arith.extui %0 : i1 to i32
    %c0_i32_0 = arith.constant 0 : i32
    %2 = arith.cmpi ne, %1, %c0_i32_0 : i32
    scf.if %2 {
      %cst_112 = arith.constant 0.000000e+00 : f32
      %306 = vector.broadcast %cst_112 : f32 to vector<8x128xf32>
      %c0_113 = arith.constant 0 : index
      %c0_114 = arith.constant 0 : index
      %307 = vector.load %arg10[%c0_113, %c0_114] : memref<8x128xf32, #tpu.memory_space<vmem>>, vector<8x128xf32>
      tpu.vector_store %arg10[%c0_113, %c0_114], %306 {strides = array<i32>} : memref<8x128xf32, #tpu.memory_space<vmem>>, vector<8x128xf32>,
      %cst_115 = arith.constant 0.000000e+00 : f32
      %308 = vector.broadcast %cst_115 : f32 to vector<8x128xf32>
      %c0_116 = arith.constant 0 : index
      %c0_117 = arith.constant 0 : index
      %309 = vector.load %arg11[%c0_116, %c0_117] : memref<8x128xf32, #tpu.memory_space<vmem>>, vector<8x128xf32>
      tpu.vector_store %arg11[%c0_116, %c0_117], %308 {strides = array<i32>} : memref<8x128xf32, #tpu.memory_space<vmem>>, vector<8x128xf32>,
    } else {
    }
    %c0 = arith.constant 0 : index
    %c0_1 = arith.constant 0 : index
    %c0_2 = arith.constant 0 : index
    %3 = vector.load %arg2[%c0, %c0_1, %c0_2] : memref<8x8x128xbf16, #tpu.memory_space<vmem>>, vector<8x8x128xbf16>
    %4 = vector.shape_cast %3 : vector<8x8x128xbf16> to vector<64x128xbf16>
    %c0_3 = arith.constant 0 : index
    %c0_4 = arith.constant 0 : index
    %5 = vector.load %arg4[%c0_3, %c0_4] : memref<128x512xbf16, #tpu.memory_space<vmem>>, vector<128x512xbf16>
    %cst = arith.constant dense<0.000000e+00> : vector<64x512xf32>
    %6 = tpu.matmul %4, %5, %cst {dimension_numbers = #tpu.dot_dimension_numbers<[1], [0], [0], [1], [0, 0, 1, 1], [], []>} : vector<64x128xbf16>, vector<128x512xbf16>, vector<64x512xf32> -> vector<64x512xf32>
    %c0_5 = arith.constant 0 : index
    %c0_6 = arith.constant 0 : index
    %7 = vector.load %arg6[%c0_5, %c0_6] : memref<1x512xf32, #tpu.memory_space<vmem>>, vector<1x512xf32>
    %8 = vector.broadcast %7 : vector<1x512xf32> to vector<64x512xf32>
    %9 = arith.addf %6, %8 : vector<64x512xf32>
    %10 = vector.shape_cast %9 : vector<64x512xf32> to vector<8x8x512xf32>
    %c0_7 = arith.constant 0 : index
    %c0_8 = arith.constant 0 : index
    %c0_9 = arith.constant 0 : index
    %11 = vector.load %arg12[%c0_7, %c0_8, %c0_9] : memref<8x8x512xf32, #tpu.memory_space<vmem>>, vector<8x8x512xf32>
    tpu.vector_store %arg12[%c0_7, %c0_8, %c0_9], %10 {strides = array<i32>} : memref<8x8x512xf32, #tpu.memory_space<vmem>>, vector<8x8x512xf32>,
    %c0_10 = arith.constant 0 : index
    %c0_11 = arith.constant 0 : index
    %12 = vector.load %arg5[%c0_10, %c0_11] : memref<128x512xf32, #tpu.memory_space<vmem>>, vector<128x512xf32>
    %c0_12 = arith.constant 0 : index
    %c0_13 = arith.constant 0 : index
    %13 = vector.load %arg10[%c0_12, %c0_13] : memref<8x128xf32, #tpu.memory_space<vmem>>, vector<8x128xf32>
    %c0_14 = arith.constant 0 : index
    %c0_15 = arith.constant 0 : index
    %14 = vector.load %arg11[%c0_14, %c0_15] : memref<8x128xf32, #tpu.memory_space<vmem>>, vector<8x128xf32>
    %c0_i32_16 = arith.constant 0 : i32
    %15 = arith.index_cast %c0_i32_16 : i32 to index
    %c0_17 = arith.constant 0 : index
    %c0_18 = arith.constant 0 : index
    %16 = vector.load %arg12[%15, %c0_17, %c0_18] : memref<8x8x512xf32, #tpu.memory_space<vmem>>, vector<1x8x512xf32>
    %17 = vector.shape_cast %16 : vector<1x8x512xf32> to vector<8x512xf32>
    %cst_19 = arith.constant dense<0.000000e+00> : vector<8x512xf32>
    %18 = tpu.matmul %13, %12, %cst_19 {dimension_numbers = #tpu.dot_dimension_numbers<[1], [0], [0], [1], [0, 0, 1, 1], [], []>} : vector<8x128xf32>, vector<128x512xf32>, vector<8x512xf32> -> vector<8x512xf32>
    %19 = arith.addf %17, %18 : vector<8x512xf32>
    %20 = vector.extract_strided_slice %19 {offsets = [0, 0], sizes = [8, 384], strides = [1, 1]} : vector<8x512xf32> to vector<8x384xf32>
    %21 = arith.negf %20 : vector<8x384xf32>
    %22 = math.exp %21 : vector<8x384xf32>
    %cst_20 = arith.constant 1.000000e+00 : f32
    %23 = vector.broadcast %cst_20 : f32 to vector<8x384xf32>
    %24 = arith.addf %23, %22 : vector<8x384xf32>
    %25 = arith.divf %23, %24 : vector<8x384xf32>
    %26 = vector.extract_strided_slice %25 {offsets = [0, 0], sizes = [8, 128], strides = [1, 1]} : vector<8x384xf32> to vector<8x128xf32>
    %27 = vector.extract_strided_slice %25 {offsets = [0, 128], sizes = [8, 128], strides = [1, 1]} : vector<8x384xf32> to vector<8x128xf32>
    %28 = vector.extract_strided_slice %25 {offsets = [0, 256], sizes = [8, 128], strides = [1, 1]} : vector<8x384xf32> to vector<8x128xf32>
    %29 = vector.extract_strided_slice %19 {offsets = [0, 384], sizes = [8, 128], strides = [1, 1]} : vector<8x512xf32> to vector<8x128xf32>
    %30 = math.tanh %29 : vector<8x128xf32>
    %31 = arith.mulf %27, %14 : vector<8x128xf32>
    %32 = arith.mulf %26, %30 : vector<8x128xf32>
    %33 = arith.addf %31, %32 : vector<8x128xf32>
    %34 = math.tanh %33 : vector<8x128xf32>
    %35 = arith.mulf %28, %34 : vector<8x128xf32>
    %36 = arith.index_cast %c0_i32_16 : i32 to index
    %c0_21 = arith.constant 0 : index
    %c0_22 = arith.constant 0 : index
    %37 = vector.load %arg3[%36, %c0_21, %c0_22] : memref<8x8x1xf32, #tpu.memory_space<vmem>>, vector<1x8x1xf32>
    %38 = vector.shape_cast %37 : vector<1x8x1xf32> to vector<8x1xf32>
    %cst_23 = arith.constant 0.000000e+00 : f32
    %39 = vector.broadcast %cst_23 : f32 to vector<8x1xf32>
    %40 = arith.cmpf ogt, %38, %39 : vector<8x1xf32>
    %cst_24 = arith.constant 0.000000e+00 : f32
    %41 = vector.shape_cast %40 : vector<8x1xi1> to vector<8x1xi1>
    %42 = vector.broadcast %41 : vector<8x1xi1> to vector<8x128xi1>
    %43 = vector.broadcast %cst_24 : f32 to vector<8x128xf32>
    %44 = arith.select %42, %35, %43 : vector<8x128xi1>, vector<8x128xf32>
    %45 = arith.truncf %44 : vector<8x128xf32> to vector<8x128xbf16>
    %46 = arith.index_cast %c0_i32_16 : i32 to index
    %c0_25 = arith.constant 0 : index
    %c0_26 = arith.constant 0 : index
    %47 = vector.load %arg13[%46, %c0_25, %c0_26] : memref<8x8x128xbf16, #tpu.memory_space<vmem>>, vector<1x8x128xbf16>
    %48 = vector.shape_cast %47 : vector<1x8x128xbf16> to vector<8x128xbf16>
    %49 = vector.shape_cast %45 : vector<8x128xbf16> to vector<1x8x128xbf16>
    tpu.vector_store %arg13[%46, %c0_25, %c0_26], %49 {strides = array<i32>} : memref<8x8x128xbf16, #tpu.memory_space<vmem>>, vector<1x8x128xbf16>,
    %c1_i32 = arith.constant 1 : i32
    %50 = arith.index_cast %c1_i32 : i32 to index
    %c0_27 = arith.constant 0 : index
    %c0_28 = arith.constant 0 : index
    %51 = vector.load %arg12[%50, %c0_27, %c0_28] : memref<8x8x512xf32, #tpu.memory_space<vmem>>, vector<1x8x512xf32>
    %52 = vector.shape_cast %51 : vector<1x8x512xf32> to vector<8x512xf32>
    %cst_29 = arith.constant dense<0.000000e+00> : vector<8x512xf32>
    %53 = tpu.matmul %35, %12, %cst_29 {dimension_numbers = #tpu.dot_dimension_numbers<[1], [0], [0], [1], [0, 0, 1, 1], [], []>} : vector<8x128xf32>, vector<128x512xf32>, vector<8x512xf32> -> vector<8x512xf32>
    %54 = arith.addf %52, %53 : vector<8x512xf32>
    %55 = vector.extract_strided_slice %54 {offsets = [0, 0], sizes = [8, 384], strides = [1, 1]} : vector<8x512xf32> to vector<8x384xf32>
    %56 = arith.negf %55 : vector<8x384xf32>
    %57 = math.exp %56 : vector<8x384xf32>
    %cst_30 = arith.constant 1.000000e+00 : f32
    %58 = vector.broadcast %cst_30 : f32 to vector<8x384xf32>
    %59 = arith.addf %58, %57 : vector<8x384xf32>
    %60 = arith.divf %58, %59 : vector<8x384xf32>
    %61 = vector.extract_strided_slice %60 {offsets = [0, 0], sizes = [8, 128], strides = [1, 1]} : vector<8x384xf32> to vector<8x128xf32>
    %62 = vector.extract_strided_slice %60 {offsets = [0, 128], sizes = [8, 128], strides = [1, 1]} : vector<8x384xf32> to vector<8x128xf32>
    %63 = vector.extract_strided_slice %60 {offsets = [0, 256], sizes = [8, 128], strides = [1, 1]} : vector<8x384xf32> to vector<8x128xf32>
    %64 = vector.extract_strided_slice %54 {offsets = [0, 384], sizes = [8, 128], strides = [1, 1]} : vector<8x512xf32> to vector<8x128xf32>
    %65 = math.tanh %64 : vector<8x128xf32>
    %66 = arith.mulf %62, %33 : vector<8x128xf32>
    %67 = arith.mulf %61, %65 : vector<8x128xf32>
    %68 = arith.addf %66, %67 : vector<8x128xf32>
    %69 = math.tanh %68 : vector<8x128xf32>
    %70 = arith.mulf %63, %69 : vector<8x128xf32>
    %71 = arith.index_cast %c1_i32 : i32 to index
    %c0_31 = arith.constant 0 : index
    %c0_32 = arith.constant 0 : index
    %72 = vector.load %arg3[%71, %c0_31, %c0_32] : memref<8x8x1xf32, #tpu.memory_space<vmem>>, vector<1x8x1xf32>
    %73 = vector.shape_cast %72 : vector<1x8x1xf32> to vector<8x1xf32>
    %cst_33 = arith.constant 0.000000e+00 : f32
    %74 = vector.broadcast %cst_33 : f32 to vector<8x1xf32>
    %75 = arith.cmpf ogt, %73, %74 : vector<8x1xf32>
    %cst_34 = arith.constant 0.000000e+00 : f32
    %76 = vector.shape_cast %75 : vector<8x1xi1> to vector<8x1xi1>
    %77 = vector.broadcast %76 : vector<8x1xi1> to vector<8x128xi1>
    %78 = vector.broadcast %cst_34 : f32 to vector<8x128xf32>
    %79 = arith.select %77, %70, %78 : vector<8x128xi1>, vector<8x128xf32>
    %80 = arith.truncf %79 : vector<8x128xf32> to vector<8x128xbf16>
    %81 = arith.index_cast %c1_i32 : i32 to index
    %c0_35 = arith.constant 0 : index
    %c0_36 = arith.constant 0 : index
    %82 = vector.load %arg13[%81, %c0_35, %c0_36] : memref<8x8x128xbf16, #tpu.memory_space<vmem>>, vector<1x8x128xbf16>
    %83 = vector.shape_cast %82 : vector<1x8x128xbf16> to vector<8x128xbf16>
    %84 = vector.shape_cast %80 : vector<8x128xbf16> to vector<1x8x128xbf16>
    tpu.vector_store %arg13[%81, %c0_35, %c0_36], %84 {strides = array<i32>} : memref<8x8x128xbf16, #tpu.memory_space<vmem>>, vector<1x8x128xbf16>,
    %c2_i32 = arith.constant 2 : i32
    %85 = arith.index_cast %c2_i32 : i32 to index
    %c0_37 = arith.constant 0 : index
    %c0_38 = arith.constant 0 : index
    %86 = vector.load %arg12[%85, %c0_37, %c0_38] : memref<8x8x512xf32, #tpu.memory_space<vmem>>, vector<1x8x512xf32>
    %87 = vector.shape_cast %86 : vector<1x8x512xf32> to vector<8x512xf32>
    %cst_39 = arith.constant dense<0.000000e+00> : vector<8x512xf32>
    %88 = tpu.matmul %70, %12, %cst_39 {dimension_numbers = #tpu.dot_dimension_numbers<[1], [0], [0], [1], [0, 0, 1, 1], [], []>} : vector<8x128xf32>, vector<128x512xf32>, vector<8x512xf32> -> vector<8x512xf32>
    %89 = arith.addf %87, %88 : vector<8x512xf32>
    %90 = vector.extract_strided_slice %89 {offsets = [0, 0], sizes = [8, 384], strides = [1, 1]} : vector<8x512xf32> to vector<8x384xf32>
    %91 = arith.negf %90 : vector<8x384xf32>
    %92 = math.exp %91 : vector<8x384xf32>
    %cst_40 = arith.constant 1.000000e+00 : f32
    %93 = vector.broadcast %cst_40 : f32 to vector<8x384xf32>
    %94 = arith.addf %93, %92 : vector<8x384xf32>
    %95 = arith.divf %93, %94 : vector<8x384xf32>
    %96 = vector.extract_strided_slice %95 {offsets = [0, 0], sizes = [8, 128], strides = [1, 1]} : vector<8x384xf32> to vector<8x128xf32>
    %97 = vector.extract_strided_slice %95 {offsets = [0, 128], sizes = [8, 128], strides = [1, 1]} : vector<8x384xf32> to vector<8x128xf32>
    %98 = vector.extract_strided_slice %95 {offsets = [0, 256], sizes = [8, 128], strides = [1, 1]} : vector<8x384xf32> to vector<8x128xf32>
    %99 = vector.extract_strided_slice %89 {offsets = [0, 384], sizes = [8, 128], strides = [1, 1]} : vector<8x512xf32> to vector<8x128xf32>
    %100 = math.tanh %99 : vector<8x128xf32>
    %101 = arith.mulf %97, %68 : vector<8x128xf32>
    %102 = arith.mulf %96, %100 : vector<8x128xf32>
    %103 = arith.addf %101, %102 : vector<8x128xf32>
    %104 = math.tanh %103 : vector<8x128xf32>
    %105 = arith.mulf %98, %104 : vector<8x128xf32>
    %106 = arith.index_cast %c2_i32 : i32 to index
    %c0_41 = arith.constant 0 : index
    %c0_42 = arith.constant 0 : index
    %107 = vector.load %arg3[%106, %c0_41, %c0_42] : memref<8x8x1xf32, #tpu.memory_space<vmem>>, vector<1x8x1xf32>
    %108 = vector.shape_cast %107 : vector<1x8x1xf32> to vector<8x1xf32>
    %cst_43 = arith.constant 0.000000e+00 : f32
    %109 = vector.broadcast %cst_43 : f32 to vector<8x1xf32>
    %110 = arith.cmpf ogt, %108, %109 : vector<8x1xf32>
    %cst_44 = arith.constant 0.000000e+00 : f32
    %111 = vector.shape_cast %110 : vector<8x1xi1> to vector<8x1xi1>
    %112 = vector.broadcast %111 : vector<8x1xi1> to vector<8x128xi1>
    %113 = vector.broadcast %cst_44 : f32 to vector<8x128xf32>
    %114 = arith.select %112, %105, %113 : vector<8x128xi1>, vector<8x128xf32>
    %115 = arith.truncf %114 : vector<8x128xf32> to vector<8x128xbf16>
    %116 = arith.index_cast %c2_i32 : i32 to index
    %c0_45 = arith.constant 0 : index
    %c0_46 = arith.constant 0 : index
    %117 = vector.load %arg13[%116, %c0_45, %c0_46] : memref<8x8x128xbf16, #tpu.memory_space<vmem>>, vector<1x8x128xbf16>
    %118 = vector.shape_cast %117 : vector<1x8x128xbf16> to vector<8x128xbf16>
    %119 = vector.shape_cast %115 : vector<8x128xbf16> to vector<1x8x128xbf16>
    tpu.vector_store %arg13[%116, %c0_45, %c0_46], %119 {strides = array<i32>} : memref<8x8x128xbf16, #tpu.memory_space<vmem>>, vector<1x8x128xbf16>,
    %c3_i32 = arith.constant 3 : i32
    %120 = arith.index_cast %c3_i32 : i32 to index
    %c0_47 = arith.constant 0 : index
    %c0_48 = arith.constant 0 : index
    %121 = vector.load %arg12[%120, %c0_47, %c0_48] : memref<8x8x512xf32, #tpu.memory_space<vmem>>, vector<1x8x512xf32>
    %122 = vector.shape_cast %121 : vector<1x8x512xf32> to vector<8x512xf32>
    %cst_49 = arith.constant dense<0.000000e+00> : vector<8x512xf32>
    %123 = tpu.matmul %105, %12, %cst_49 {dimension_numbers = #tpu.dot_dimension_numbers<[1], [0], [0], [1], [0, 0, 1, 1], [], []>} : vector<8x128xf32>, vector<128x512xf32>, vector<8x512xf32> -> vector<8x512xf32>
    %124 = arith.addf %122, %123 : vector<8x512xf32>
    %125 = vector.extract_strided_slice %124 {offsets = [0, 0], sizes = [8, 384], strides = [1, 1]} : vector<8x512xf32> to vector<8x384xf32>
    %126 = arith.negf %125 : vector<8x384xf32>
    %127 = math.exp %126 : vector<8x384xf32>
    %cst_50 = arith.constant 1.000000e+00 : f32
    %128 = vector.broadcast %cst_50 : f32 to vector<8x384xf32>
    %129 = arith.addf %128, %127 : vector<8x384xf32>
    %130 = arith.divf %128, %129 : vector<8x384xf32>
    %131 = vector.extract_strided_slice %130 {offsets = [0, 0], sizes = [8, 128], strides = [1, 1]} : vector<8x384xf32> to vector<8x128xf32>
    %132 = vector.extract_strided_slice %130 {offsets = [0, 128], sizes = [8, 128], strides = [1, 1]} : vector<8x384xf32> to vector<8x128xf32>
    %133 = vector.extract_strided_slice %130 {offsets = [0, 256], sizes = [8, 128], strides = [1, 1]} : vector<8x384xf32> to vector<8x128xf32>
    %134 = vector.extract_strided_slice %124 {offsets = [0, 384], sizes = [8, 128], strides = [1, 1]} : vector<8x512xf32> to vector<8x128xf32>
    %135 = math.tanh %134 : vector<8x128xf32>
    %136 = arith.mulf %132, %103 : vector<8x128xf32>
    %137 = arith.mulf %131, %135 : vector<8x128xf32>
    %138 = arith.addf %136, %137 : vector<8x128xf32>
    %139 = math.tanh %138 : vector<8x128xf32>
    %140 = arith.mulf %133, %139 : vector<8x128xf32>
    %141 = arith.index_cast %c3_i32 : i32 to index
    %c0_51 = arith.constant 0 : index
    %c0_52 = arith.constant 0 : index
    %142 = vector.load %arg3[%141, %c0_51, %c0_52] : memref<8x8x1xf32, #tpu.memory_space<vmem>>, vector<1x8x1xf32>
    %143 = vector.shape_cast %142 : vector<1x8x1xf32> to vector<8x1xf32>
    %cst_53 = arith.constant 0.000000e+00 : f32
    %144 = vector.broadcast %cst_53 : f32 to vector<8x1xf32>
    %145 = arith.cmpf ogt, %143, %144 : vector<8x1xf32>
    %cst_54 = arith.constant 0.000000e+00 : f32
    %146 = vector.shape_cast %145 : vector<8x1xi1> to vector<8x1xi1>
    %147 = vector.broadcast %146 : vector<8x1xi1> to vector<8x128xi1>
    %148 = vector.broadcast %cst_54 : f32 to vector<8x128xf32>
    %149 = arith.select %147, %140, %148 : vector<8x128xi1>, vector<8x128xf32>
    %150 = arith.truncf %149 : vector<8x128xf32> to vector<8x128xbf16>
    %151 = arith.index_cast %c3_i32 : i32 to index
    %c0_55 = arith.constant 0 : index
    %c0_56 = arith.constant 0 : index
    %152 = vector.load %arg13[%151, %c0_55, %c0_56] : memref<8x8x128xbf16, #tpu.memory_space<vmem>>, vector<1x8x128xbf16>
    %153 = vector.shape_cast %152 : vector<1x8x128xbf16> to vector<8x128xbf16>
    %154 = vector.shape_cast %150 : vector<8x128xbf16> to vector<1x8x128xbf16>
    tpu.vector_store %arg13[%151, %c0_55, %c0_56], %154 {strides = array<i32>} : memref<8x8x128xbf16, #tpu.memory_space<vmem>>, vector<1x8x128xbf16>,
    %c4_i32 = arith.constant 4 : i32
    %155 = arith.index_cast %c4_i32 : i32 to index
    %c0_57 = arith.constant 0 : index
    %c0_58 = arith.constant 0 : index
    %156 = vector.load %arg12[%155, %c0_57, %c0_58] : memref<8x8x512xf32, #tpu.memory_space<vmem>>, vector<1x8x512xf32>
    %157 = vector.shape_cast %156 : vector<1x8x512xf32> to vector<8x512xf32>
    %cst_59 = arith.constant dense<0.000000e+00> : vector<8x512xf32>
    %158 = tpu.matmul %140, %12, %cst_59 {dimension_numbers = #tpu.dot_dimension_numbers<[1], [0], [0], [1], [0, 0, 1, 1], [], []>} : vector<8x128xf32>, vector<128x512xf32>, vector<8x512xf32> -> vector<8x512xf32>
    %159 = arith.addf %157, %158 : vector<8x512xf32>
    %160 = vector.extract_strided_slice %159 {offsets = [0, 0], sizes = [8, 384], strides = [1, 1]} : vector<8x512xf32> to vector<8x384xf32>
    %161 = arith.negf %160 : vector<8x384xf32>
    %162 = math.exp %161 : vector<8x384xf32>
    %cst_60 = arith.constant 1.000000e+00 : f32
    %163 = vector.broadcast %cst_60 : f32 to vector<8x384xf32>
    %164 = arith.addf %163, %162 : vector<8x384xf32>
    %165 = arith.divf %163, %164 : vector<8x384xf32>
    %166 = vector.extract_strided_slice %165 {offsets = [0, 0], sizes = [8, 128], strides = [1, 1]} : vector<8x384xf32> to vector<8x128xf32>
    %167 = vector.extract_strided_slice %165 {offsets = [0, 128], sizes = [8, 128], strides = [1, 1]} : vector<8x384xf32> to vector<8x128xf32>
    %168 = vector.extract_strided_slice %165 {offsets = [0, 256], sizes = [8, 128], strides = [1, 1]} : vector<8x384xf32> to vector<8x128xf32>
    %169 = vector.extract_strided_slice %159 {offsets = [0, 384], sizes = [8, 128], strides = [1, 1]} : vector<8x512xf32> to vector<8x128xf32>
    %170 = math.tanh %169 : vector<8x128xf32>
    %171 = arith.mulf %167, %138 : vector<8x128xf32>
    %172 = arith.mulf %166, %170 : vector<8x128xf32>
    %173 = arith.addf %171, %172 : vector<8x128xf32>
    %174 = math.tanh %173 : vector<8x128xf32>
    %175 = arith.mulf %168, %174 : vector<8x128xf32>
    %176 = arith.index_cast %c4_i32 : i32 to index
    %c0_61 = arith.constant 0 : index
    %c0_62 = arith.constant 0 : index
    %177 = vector.load %arg3[%176, %c0_61, %c0_62] : memref<8x8x1xf32, #tpu.memory_space<vmem>>, vector<1x8x1xf32>
    %178 = vector.shape_cast %177 : vector<1x8x1xf32> to vector<8x1xf32>
    %cst_63 = arith.constant 0.000000e+00 : f32
    %179 = vector.broadcast %cst_63 : f32 to vector<8x1xf32>
    %180 = arith.cmpf ogt, %178, %179 : vector<8x1xf32>
    %cst_64 = arith.constant 0.000000e+00 : f32
    %181 = vector.shape_cast %180 : vector<8x1xi1> to vector<8x1xi1>
    %182 = vector.broadcast %181 : vector<8x1xi1> to vector<8x128xi1>
    %183 = vector.broadcast %cst_64 : f32 to vector<8x128xf32>
    %184 = arith.select %182, %175, %183 : vector<8x128xi1>, vector<8x128xf32>
    %185 = arith.truncf %184 : vector<8x128xf32> to vector<8x128xbf16>
    %186 = arith.index_cast %c4_i32 : i32 to index
    %c0_65 = arith.constant 0 : index
    %c0_66 = arith.constant 0 : index
    %187 = vector.load %arg13[%186, %c0_65, %c0_66] : memref<8x8x128xbf16, #tpu.memory_space<vmem>>, vector<1x8x128xbf16>
    %188 = vector.shape_cast %187 : vector<1x8x128xbf16> to vector<8x128xbf16>
    %189 = vector.shape_cast %185 : vector<8x128xbf16> to vector<1x8x128xbf16>
    tpu.vector_store %arg13[%186, %c0_65, %c0_66], %189 {strides = array<i32>} : memref<8x8x128xbf16, #tpu.memory_space<vmem>>, vector<1x8x128xbf16>,
    %c5_i32 = arith.constant 5 : i32
    %190 = arith.index_cast %c5_i32 : i32 to index
    %c0_67 = arith.constant 0 : index
    %c0_68 = arith.constant 0 : index
    %191 = vector.load %arg12[%190, %c0_67, %c0_68] : memref<8x8x512xf32, #tpu.memory_space<vmem>>, vector<1x8x512xf32>
    %192 = vector.shape_cast %191 : vector<1x8x512xf32> to vector<8x512xf32>
    %cst_69 = arith.constant dense<0.000000e+00> : vector<8x512xf32>
    %193 = tpu.matmul %175, %12, %cst_69 {dimension_numbers = #tpu.dot_dimension_numbers<[1], [0], [0], [1], [0, 0, 1, 1], [], []>} : vector<8x128xf32>, vector<128x512xf32>, vector<8x512xf32> -> vector<8x512xf32>
    %194 = arith.addf %192, %193 : vector<8x512xf32>
    %195 = vector.extract_strided_slice %194 {offsets = [0, 0], sizes = [8, 384], strides = [1, 1]} : vector<8x512xf32> to vector<8x384xf32>
    %196 = arith.negf %195 : vector<8x384xf32>
    %197 = math.exp %196 : vector<8x384xf32>
    %cst_70 = arith.constant 1.000000e+00 : f32
    %198 = vector.broadcast %cst_70 : f32 to vector<8x384xf32>
    %199 = arith.addf %198, %197 : vector<8x384xf32>
    %200 = arith.divf %198, %199 : vector<8x384xf32>
    %201 = vector.extract_strided_slice %200 {offsets = [0, 0], sizes = [8, 128], strides = [1, 1]} : vector<8x384xf32> to vector<8x128xf32>
    %202 = vector.extract_strided_slice %200 {offsets = [0, 128], sizes = [8, 128], strides = [1, 1]} : vector<8x384xf32> to vector<8x128xf32>
    %203 = vector.extract_strided_slice %200 {offsets = [0, 256], sizes = [8, 128], strides = [1, 1]} : vector<8x384xf32> to vector<8x128xf32>
    %204 = vector.extract_strided_slice %194 {offsets = [0, 384], sizes = [8, 128], strides = [1, 1]} : vector<8x512xf32> to vector<8x128xf32>
    %205 = math.tanh %204 : vector<8x128xf32>
    %206 = arith.mulf %202, %173 : vector<8x128xf32>
    %207 = arith.mulf %201, %205 : vector<8x128xf32>
    %208 = arith.addf %206, %207 : vector<8x128xf32>
    %209 = math.tanh %208 : vector<8x128xf32>
    %210 = arith.mulf %203, %209 : vector<8x128xf32>
    %211 = arith.index_cast %c5_i32 : i32 to index
    %c0_71 = arith.constant 0 : index
    %c0_72 = arith.constant 0 : index
    %212 = vector.load %arg3[%211, %c0_71, %c0_72] : memref<8x8x1xf32, #tpu.memory_space<vmem>>, vector<1x8x1xf32>
    %213 = vector.shape_cast %212 : vector<1x8x1xf32> to vector<8x1xf32>
    %cst_73 = arith.constant 0.000000e+00 : f32
    %214 = vector.broadcast %cst_73 : f32 to vector<8x1xf32>
    %215 = arith.cmpf ogt, %213, %214 : vector<8x1xf32>
    %cst_74 = arith.constant 0.000000e+00 : f32
    %216 = vector.shape_cast %215 : vector<8x1xi1> to vector<8x1xi1>
    %217 = vector.broadcast %216 : vector<8x1xi1> to vector<8x128xi1>
    %218 = vector.broadcast %cst_74 : f32 to vector<8x128xf32>
    %219 = arith.select %217, %210, %218 : vector<8x128xi1>, vector<8x128xf32>
    %220 = arith.truncf %219 : vector<8x128xf32> to vector<8x128xbf16>
    %221 = arith.index_cast %c5_i32 : i32 to index
    %c0_75 = arith.constant 0 : index
    %c0_76 = arith.constant 0 : index
    %222 = vector.load %arg13[%221, %c0_75, %c0_76] : memref<8x8x128xbf16, #tpu.memory_space<vmem>>, vector<1x8x128xbf16>
    %223 = vector.shape_cast %222 : vector<1x8x128xbf16> to vector<8x128xbf16>
    %224 = vector.shape_cast %220 : vector<8x128xbf16> to vector<1x8x128xbf16>
    tpu.vector_store %arg13[%221, %c0_75, %c0_76], %224 {strides = array<i32>} : memref<8x8x128xbf16, #tpu.memory_space<vmem>>, vector<1x8x128xbf16>,
    %c6_i32 = arith.constant 6 : i32
    %225 = arith.index_cast %c6_i32 : i32 to index
    %c0_77 = arith.constant 0 : index
    %c0_78 = arith.constant 0 : index
    %226 = vector.load %arg12[%225, %c0_77, %c0_78] : memref<8x8x512xf32, #tpu.memory_space<vmem>>, vector<1x8x512xf32>
    %227 = vector.shape_cast %226 : vector<1x8x512xf32> to vector<8x512xf32>
    %cst_79 = arith.constant dense<0.000000e+00> : vector<8x512xf32>
    %228 = tpu.matmul %210, %12, %cst_79 {dimension_numbers = #tpu.dot_dimension_numbers<[1], [0], [0], [1], [0, 0, 1, 1], [], []>} : vector<8x128xf32>, vector<128x512xf32>, vector<8x512xf32> -> vector<8x512xf32>
    %229 = arith.addf %227, %228 : vector<8x512xf32>
    %230 = vector.extract_strided_slice %229 {offsets = [0, 0], sizes = [8, 384], strides = [1, 1]} : vector<8x512xf32> to vector<8x384xf32>
    %231 = arith.negf %230 : vector<8x384xf32>
    %232 = math.exp %231 : vector<8x384xf32>
    %cst_80 = arith.constant 1.000000e+00 : f32
    %233 = vector.broadcast %cst_80 : f32 to vector<8x384xf32>
    %234 = arith.addf %233, %232 : vector<8x384xf32>
    %235 = arith.divf %233, %234 : vector<8x384xf32>
    %236 = vector.extract_strided_slice %235 {offsets = [0, 0], sizes = [8, 128], strides = [1, 1]} : vector<8x384xf32> to vector<8x128xf32>
    %237 = vector.extract_strided_slice %235 {offsets = [0, 128], sizes = [8, 128], strides = [1, 1]} : vector<8x384xf32> to vector<8x128xf32>
    %238 = vector.extract_strided_slice %235 {offsets = [0, 256], sizes = [8, 128], strides = [1, 1]} : vector<8x384xf32> to vector<8x128xf32>
    %239 = vector.extract_strided_slice %229 {offsets = [0, 384], sizes = [8, 128], strides = [1, 1]} : vector<8x512xf32> to vector<8x128xf32>
    %240 = math.tanh %239 : vector<8x128xf32>
    %241 = arith.mulf %237, %208 : vector<8x128xf32>
    %242 = arith.mulf %236, %240 : vector<8x128xf32>
    %243 = arith.addf %241, %242 : vector<8x128xf32>
    %244 = math.tanh %243 : vector<8x128xf32>
    %245 = arith.mulf %238, %244 : vector<8x128xf32>
    %246 = arith.index_cast %c6_i32 : i32 to index
    %c0_81 = arith.constant 0 : index
    %c0_82 = arith.constant 0 : index
    %247 = vector.load %arg3[%246, %c0_81, %c0_82] : memref<8x8x1xf32, #tpu.memory_space<vmem>>, vector<1x8x1xf32>
    %248 = vector.shape_cast %247 : vector<1x8x1xf32> to vector<8x1xf32>
    %cst_83 = arith.constant 0.000000e+00 : f32
    %249 = vector.broadcast %cst_83 : f32 to vector<8x1xf32>
    %250 = arith.cmpf ogt, %248, %249 : vector<8x1xf32>
    %cst_84 = arith.constant 0.000000e+00 : f32
    %251 = vector.shape_cast %250 : vector<8x1xi1> to vector<8x1xi1>
    %252 = vector.broadcast %251 : vector<8x1xi1> to vector<8x128xi1>
    %253 = vector.broadcast %cst_84 : f32 to vector<8x128xf32>
    %254 = arith.select %252, %245, %253 : vector<8x128xi1>, vector<8x128xf32>
    %255 = arith.truncf %254 : vector<8x128xf32> to vector<8x128xbf16>
    %256 = arith.index_cast %c6_i32 : i32 to index
    %c0_85 = arith.constant 0 : index
    %c0_86 = arith.constant 0 : index
    %257 = vector.load %arg13[%256, %c0_85, %c0_86] : memref<8x8x128xbf16, #tpu.memory_space<vmem>>, vector<1x8x128xbf16>
    %258 = vector.shape_cast %257 : vector<1x8x128xbf16> to vector<8x128xbf16>
    %259 = vector.shape_cast %255 : vector<8x128xbf16> to vector<1x8x128xbf16>
    tpu.vector_store %arg13[%256, %c0_85, %c0_86], %259 {strides = array<i32>} : memref<8x8x128xbf16, #tpu.memory_space<vmem>>, vector<1x8x128xbf16>,
    %c7_i32 = arith.constant 7 : i32
    %260 = arith.index_cast %c7_i32 : i32 to index
    %c0_87 = arith.constant 0 : index
    %c0_88 = arith.constant 0 : index
    %261 = vector.load %arg12[%260, %c0_87, %c0_88] : memref<8x8x512xf32, #tpu.memory_space<vmem>>, vector<1x8x512xf32>
    %262 = vector.shape_cast %261 : vector<1x8x512xf32> to vector<8x512xf32>
    %cst_89 = arith.constant dense<0.000000e+00> : vector<8x512xf32>
    %263 = tpu.matmul %245, %12, %cst_89 {dimension_numbers = #tpu.dot_dimension_numbers<[1], [0], [0], [1], [0, 0, 1, 1], [], []>} : vector<8x128xf32>, vector<128x512xf32>, vector<8x512xf32> -> vector<8x512xf32>
    %264 = arith.addf %262, %263 : vector<8x512xf32>
    %265 = vector.extract_strided_slice %264 {offsets = [0, 0], sizes = [8, 384], strides = [1, 1]} : vector<8x512xf32> to vector<8x384xf32>
    %266 = arith.negf %265 : vector<8x384xf32>
    %267 = math.exp %266 : vector<8x384xf32>
    %cst_90 = arith.constant 1.000000e+00 : f32
    %268 = vector.broadcast %cst_90 : f32 to vector<8x384xf32>
    %269 = arith.addf %268, %267 : vector<8x384xf32>
    %270 = arith.divf %268, %269 : vector<8x384xf32>
    %271 = vector.extract_strided_slice %270 {offsets = [0, 0], sizes = [8, 128], strides = [1, 1]} : vector<8x384xf32> to vector<8x128xf32>
    %272 = vector.extract_strided_slice %270 {offsets = [0, 128], sizes = [8, 128], strides = [1, 1]} : vector<8x384xf32> to vector<8x128xf32>
    %273 = vector.extract_strided_slice %270 {offsets = [0, 256], sizes = [8, 128], strides = [1, 1]} : vector<8x384xf32> to vector<8x128xf32>
    %274 = vector.extract_strided_slice %264 {offsets = [0, 384], sizes = [8, 128], strides = [1, 1]} : vector<8x512xf32> to vector<8x128xf32>
    %275 = math.tanh %274 : vector<8x128xf32>
    %276 = arith.mulf %272, %243 : vector<8x128xf32>
    %277 = arith.mulf %271, %275 : vector<8x128xf32>
    %278 = arith.addf %276, %277 : vector<8x128xf32>
    %279 = math.tanh %278 : vector<8x128xf32>
    %280 = arith.mulf %273, %279 : vector<8x128xf32>
    %281 = arith.index_cast %c7_i32 : i32 to index
    %c0_91 = arith.constant 0 : index
    %c0_92 = arith.constant 0 : index
    %282 = vector.load %arg3[%281, %c0_91, %c0_92] : memref<8x8x1xf32, #tpu.memory_space<vmem>>, vector<1x8x1xf32>
    %283 = vector.shape_cast %282 : vector<1x8x1xf32> to vector<8x1xf32>
    %cst_93 = arith.constant 0.000000e+00 : f32
    %284 = vector.broadcast %cst_93 : f32 to vector<8x1xf32>
    %285 = arith.cmpf ogt, %283, %284 : vector<8x1xf32>
    %cst_94 = arith.constant 0.000000e+00 : f32
    %286 = vector.shape_cast %285 : vector<8x1xi1> to vector<8x1xi1>
    %287 = vector.broadcast %286 : vector<8x1xi1> to vector<8x128xi1>
    %288 = vector.broadcast %cst_94 : f32 to vector<8x128xf32>
    %289 = arith.select %287, %280, %288 : vector<8x128xi1>, vector<8x128xf32>
    %290 = arith.truncf %289 : vector<8x128xf32> to vector<8x128xbf16>
    %291 = arith.index_cast %c7_i32 : i32 to index
    %c0_95 = arith.constant 0 : index
    %c0_96 = arith.constant 0 : index
    %292 = vector.load %arg13[%291, %c0_95, %c0_96] : memref<8x8x128xbf16, #tpu.memory_space<vmem>>, vector<1x8x128xbf16>
    %293 = vector.shape_cast %292 : vector<1x8x128xbf16> to vector<8x128xbf16>
    %294 = vector.shape_cast %290 : vector<8x128xbf16> to vector<1x8x128xbf16>
    tpu.vector_store %arg13[%291, %c0_95, %c0_96], %294 {strides = array<i32>} : memref<8x8x128xbf16, #tpu.memory_space<vmem>>, vector<1x8x128xbf16>,
    %c8_i32 = arith.constant 8 : i32
    %c0_97 = arith.constant 0 : index
    %c0_98 = arith.constant 0 : index
    %295 = vector.load %arg10[%c0_97, %c0_98] : memref<8x128xf32, #tpu.memory_space<vmem>>, vector<8x128xf32>
    tpu.vector_store %arg10[%c0_97, %c0_98], %280 {strides = array<i32>} : memref<8x128xf32, #tpu.memory_space<vmem>>, vector<8x128xf32>,
    %c0_99 = arith.constant 0 : index
    %c0_100 = arith.constant 0 : index
    %296 = vector.load %arg11[%c0_99, %c0_100] : memref<8x128xf32, #tpu.memory_space<vmem>>, vector<8x128xf32>
    tpu.vector_store %arg11[%c0_99, %c0_100], %278 {strides = array<i32>} : memref<8x128xf32, #tpu.memory_space<vmem>>, vector<8x128xf32>,
    %c0_101 = arith.constant 0 : index
    %c0_102 = arith.constant 0 : index
    %c0_103 = arith.constant 0 : index
    %297 = vector.load %arg13[%c0_101, %c0_102, %c0_103] : memref<8x8x128xbf16, #tpu.memory_space<vmem>>, vector<8x8x128xbf16>
    %298 = vector.shape_cast %297 : vector<8x8x128xbf16> to vector<64x128xbf16>
    %c0_104 = arith.constant 0 : index
    %c0_105 = arith.constant 0 : index
    %299 = vector.load %arg7[%c0_104, %c0_105] : memref<128x128xbf16, #tpu.memory_space<vmem>>, vector<128x128xbf16>
    %cst_106 = arith.constant dense<0.000000e+00> : vector<64x128xf32>
    %300 = tpu.matmul %298, %299, %cst_106 {dimension_numbers = #tpu.dot_dimension_numbers<[1], [0], [0], [1], [0, 0, 1, 1], [], []>} : vector<64x128xbf16>, vector<128x128xbf16>, vector<64x128xf32> -> vector<64x128xf32>
    %c0_107 = arith.constant 0 : index
    %c0_108 = arith.constant 0 : index
    %301 = vector.load %arg8[%c0_107, %c0_108] : memref<1x128xf32, #tpu.memory_space<vmem>>, vector<1x128xf32>
    %302 = vector.broadcast %301 : vector<1x128xf32> to vector<64x128xf32>
    %303 = arith.addf %300, %302 : vector<64x128xf32>
    %304 = vector.shape_cast %303 : vector<64x128xf32> to vector<8x8x128xf32>
    %c0_109 = arith.constant 0 : index
    %c0_110 = arith.constant 0 : index
    %c0_111 = arith.constant 0 : index
    %305 = vector.load %arg9[%c0_109, %c0_110, %c0_111] : memref<8x8x128xf32, #tpu.memory_space<vmem>>, vector<8x8x128xf32>
    tpu.vector_store %arg9[%c0_109, %c0_110, %c0_111], %304 {strides = array<i32>} : memref<8x8x128xf32, #tpu.memory_space<vmem>>, vector<8x8x128xf32>,
    return
  }
  func.func @transform_0(%arg0: i32, %arg1: i32) -> (i32, i32, i32) {
    %c0_i32 = arith.constant 0 : i32
    %c0_i32_0 = arith.constant 0 : i32
    return %arg1, %arg0, %c0_i32 : i32, i32, i32
  }
  func.func @transform_1(%arg0: i32, %arg1: i32) -> (i32, i32, i32) {
    %c0_i32 = arith.constant 0 : i32
    %c0_i32_0 = arith.constant 0 : i32
    return %arg1, %arg0, %c0_i32 : i32, i32, i32
  }
  func.func @transform_2(%arg0: i32, %arg1: i32) -> (i32, i32) {
    %c0_i32 = arith.constant 0 : i32
    %c0_i32_0 = arith.constant 0 : i32
    %c0_i32_1 = arith.constant 0 : i32
    return %c0_i32, %c0_i32_0 : i32, i32
  }
  func.func @transform_3(%arg0: i32, %arg1: i32) -> (i32, i32) {
    %c0_i32 = arith.constant 0 : i32
    %c0_i32_0 = arith.constant 0 : i32
    %c0_i32_1 = arith.constant 0 : i32
    return %c0_i32, %c0_i32_0 : i32, i32
  }
  func.func @transform_4(%arg0: i32, %arg1: i32) -> (i32, i32) {
    %c0_i32 = arith.constant 0 : i32
    %c0_i32_0 = arith.constant 0 : i32
    %c0_i32_1 = arith.constant 0 : i32
    return %c0_i32, %c0_i32_0 : i32, i32
  }
  func.func @transform_5(%arg0: i32, %arg1: i32) -> (i32, i32) {
    %c0_i32 = arith.constant 0 : i32
    %c0_i32_0 = arith.constant 0 : i32
    %c0_i32_1 = arith.constant 0 : i32
    return %c0_i32, %c0_i32_0 : i32, i32
  }
  func.func @transform_6(%arg0: i32, %arg1: i32) -> (i32, i32) {
    %c0_i32 = arith.constant 0 : i32
    %c0_i32_0 = arith.constant 0 : i32
    %c0_i32_1 = arith.constant 0 : i32
    return %c0_i32, %c0_i32_0 : i32, i32
  }
  func.func @transform_7(%arg0: i32, %arg1: i32) -> (i32, i32, i32) {
    %c0_i32 = arith.constant 0 : i32
    %c0_i32_0 = arith.constant 0 : i32
    return %arg1, %arg0, %c0_i32 : i32, i32, i32
  }
}

</mosaic_0001>

<llo_original>
// kernel: tpu_custom_call.1
$region0: #{tpu_custom_call.1}
  #allocation0 [shape = 'u32[]', space=smem, size = 0x4, offset = 0x4, fixed_abs, tag = 'smem constant byte address 0x4 - core index']
  #allocation1 [shape = 'u32[144,128]{1,0:T(1,128)}', space=vmem, size = 0x12000, scoped, tag = 'internal scratch']
  #allocation2 [shape = 'f32[8,128]{1,0:T(8,128)}', space=vmem, size = 0x1000, scoped, tag = 'scratch operand']
  #allocation3 [shape = 'f32[8,128]{1,0:T(8,128)}', space=vmem, size = 0x1000, scoped, tag = 'scratch operand']
  #allocation4 [shape = 'f32[8,8,512]{2,1,0:T(8,128)}', space=vmem, size = 0x20000, scoped, tag = 'scratch operand']
  #allocation5 [shape = 'bf16[8,8,128]{2,1,0:T(8,128)(2,1)}', space=vmem, size = 0x4000, scoped, tag = 'scratch operand']
  %s0 = inlined_call_operand.hbm [shape: bf16[8,8,128], index: 0, kind: input, shape index: {}]
  %s1 = inlined_call_operand.vmem [shape: f32[8,8,1], index: 1, kind: input, shape index: {}]
  %s2 = inlined_call_operand.hbm [shape: bf16[128,512], index: 2, kind: input, shape index: {}]
  %s3 = inlined_call_operand.hbm [shape: f32[128,512], index: 3, kind: input, shape index: {}]
  %s4 = inlined_call_operand.vmem [shape: f32[1,512], index: 4, kind: input, shape index: {}]
  %s5 = inlined_call_operand.vmem [shape: bf16[128,128], index: 5, kind: input, shape index: {}]
  %s6 = inlined_call_operand.vmem [shape: f32[1,128], index: 6, kind: input, shape index: {}]
  %s7 = inlined_call_operand.hbm [shape: f32[8,8,128], index: 7, kind: output, shape index: {}]
  %s8 = sld [smem:[#allocation0]]
  $region54: #{tpu_custom_call.1} parent=0
    _
  %s10 = ssub.s32 1, %s8
  %s11 = scalar_select 0, %s10, %s8
  $region1: #{tpu_custom_call.1} parent=0
    #allocation6 [shape = 'u8[16384]{0}', space=vmem, size = 0x4000, scoped, tag = 'input window, operand 0, single buffered']
    #allocation7 [shape = 's32[1]{0}', space=sflag, size = 0x4, scoped, tag = 'scoped memory for tpu_custom_call.1']
    #allocation8 [shape = 's32[1]{0}', space=sflag, size = 0x4, scoped, tag = 'scoped memory for tpu_custom_call.1']
    #allocation9 [shape = 'u8[131072]{0}', space=vmem, size = 0x20000, scoped, tag = 'input window, operand 2, single buffered']
    #allocation10 [shape = 's32[1]{0}', space=sflag, size = 0x4, scoped, tag = 'scoped memory for tpu_custom_call.1']
    #allocation11 [shape = 'u8[262144]{0}', space=vmem, size = 0x40000, scoped, tag = 'input window, operand 3, single buffered']
    #allocation12 [shape = 'u8[32768]{0}', space=vmem, size = 0x8000, scoped, tag = 'output window, operand 0, single buffered']
    %12 = vsyncpa [#allocation7], 0
    %13 = vsyncpa [#allocation10], 0
    %14 = vsyncpa [#allocation8], 0
    // Predicated region
    $region2: #{tpu_custom_call.1} parent=1 // pred_check
      _
    $region3: #{tpu_custom_call.1} parent=1 // pred_check_branch
      %16 = sbr.rel (0) target = $region5
    $region4: #{tpu_custom_call.1} parent=1 // pred_region
      %s18 = ssub.s32 512, 512
      %19 = vsyncadd [#allocation7], %s18
      %s20 = sshll.u32 [#allocation6], 4
      %s21 = int_to_ptr.vmem [resolvable:$true] %s20
      %26 = dma.hbm_to_vmem [thread:$0]  %s0, 512, %s21, [#allocation7], 64, 64, 4
    $region5: #{tpu_custom_call.1} parent=1 // pred_fallthru
      _
    // Predicated region
    $region6: #{tpu_custom_call.1} parent=1 // pred_check
      _
    $region7: #{tpu_custom_call.1} parent=1 // pred_check_branch
      %28 = sbr.rel (0) target = $region9
    $region8: #{tpu_custom_call.1} parent=1 // pred_region
      _
    $region9: #{tpu_custom_call.1} parent=1 // pred_fallthru
      _
    // Predicated region
    $region10: #{tpu_custom_call.1} parent=1 // pred_check
      _
    $region11: #{tpu_custom_call.1} parent=1 // pred_check_branch
      %30 = sbr.rel (0) target = $region13
    $region12: #{tpu_custom_call.1} parent=1 // pred_region
      %s32 = ssub.s32 4096, 4096
      %33 = vsyncadd [#allocation10], %s32
      %s34 = sshll.u32 [#allocation9], 4
      %s35 = int_to_ptr.vmem [resolvable:$true] %s34
      %40 = dma.hbm_to_vmem [thread:$0]  %s2, 4096, %s35, [#allocation10], 256, 256, 16
    $region13: #{tpu_custom_call.1} parent=1 // pred_fallthru
      _
    // Predicated region
    $region14: #{tpu_custom_call.1} parent=1 // pred_check
      _
    $region15: #{tpu_custom_call.1} parent=1 // pred_check_branch
      %42 = sbr.rel (0) target = $region17
    $region16: #{tpu_custom_call.1} parent=1 // pred_region
      %s44 = ssub.s32 8192, 8192
      %45 = vsyncadd [#allocation10], %s44
      %s46 = sshll.u32 [#allocation11], 4
      %s47 = int_to_ptr.vmem [resolvable:$true] %s46
      %52 = dma.hbm_to_vmem [thread:$0]  %s3, 8192, %s47, [#allocation10], 512, 512, 32
    $region17: #{tpu_custom_call.1} parent=1 // pred_fallthru
      _
    // Predicated region
    $region18: #{tpu_custom_call.1} parent=1 // pred_check
      _
    $region19: #{tpu_custom_call.1} parent=1 // pred_check_branch
      %54 = sbr.rel (0) target = $region21
    $region20: #{tpu_custom_call.1} parent=1 // pred_region
      _
    $region21: #{tpu_custom_call.1} parent=1 // pred_fallthru
      _
    // Predicated region
    $region22: #{tpu_custom_call.1} parent=1 // pred_check
      _
    $region23: #{tpu_custom_call.1} parent=1 // pred_check_branch
      %56 = sbr.rel (0) target = $region25
    $region24: #{tpu_custom_call.1} parent=1 // pred_region
      _
    $region25: #{tpu_custom_call.1} parent=1 // pred_fallthru
      _
    // Predicated region
    $region26: #{tpu_custom_call.1} parent=1 // pred_check
      _
    $region27: #{tpu_custom_call.1} parent=1 // pred_check_branch
      %58 = sbr.rel (0) target = $region29
    $region28: #{tpu_custom_call.1} parent=1 // pred_region
      _
    $region29: #{tpu_custom_call.1} parent=1 // pred_fallthru
      _
    // Predicated region
    $region30: #{tpu_custom_call.1} parent=1 // pred_check
      _
    $region31: #{tpu_custom_call.1} parent=1 // pred_check_branch
      %60 = sbr.rel (0) target = $region33
    $region32: #{tpu_custom_call.1} parent=1 // pred_region
      %61 = dma.done [#allocation7], 512
    $region33: #{tpu_custom_call.1} parent=1 // pred_fallthru
      _
    // Predicated region
    $region34: #{tpu_custom_call.1} parent=1 // pred_check
      _
    $region35: #{tpu_custom_call.1} parent=1 // pred_check_branch
      %63 = sbr.rel (0) target = $region37
    $region36: #{tpu_custom_call.1} parent=1 // pred_region
      %64 = dma.done [#allocation10], 4096
    $region37: #{tpu_custom_call.1} parent=1 // pred_fallthru
      _
    // Predicated region
    $region38: #{tpu_custom_call.1} parent=1 // pred_check
      _
    $region39: #{tpu_custom_call.1} parent=1 // pred_check_branch
      %66 = sbr.rel (0) target = $region41
    $region40: #{tpu_custom_call.1} parent=1 // pred_region
      %67 = dma.done [#allocation10], 8192
    $region41: #{tpu_custom_call.1} parent=1 // pred_fallthru
      _
    %p69 = scmp.eq.s32.totalorder 0, 0
    // Predicated region
    $region42: #{tpu_custom_call.1} parent=1 // pred_check
      %p70 = pneg %p69
    $region43: #{tpu_custom_call.1} parent=1 // pred_check_branch
      %72 = sbr.rel (%p70) target = $region45
    $region44: #{tpu_custom_call.1} parent=1 // pred_region
      %73 = vst [vmem:[#allocation2] sm:$0xff] 0.0
      %74 = vst [vmem:[#allocation3] sm:$0xff] 0.0
    $region45: #{tpu_custom_call.1} parent=1 // pred_fallthru
      _
    %v75 = vld [vmem:[#allocation6] sm:$0xf]
    %v76 = vld [vmem:[#allocation6 + $0x4] sm:$0xf]
    %v77 = vld [vmem:[#allocation6 + $0x8] sm:$0xf]
    %v78 = vld [vmem:[#allocation6 + $0xc] sm:$0xf]
    %v79 = vld [vmem:[#allocation6 + $0x10] sm:$0xf]
    %v80 = vld [vmem:[#allocation6 + $0x14] sm:$0xf]
    %v81 = vld [vmem:[#allocation6 + $0x18] sm:$0xf]
    %v82 = vld [vmem:[#allocation6 + $0x1c] sm:$0xf]
    %v83 = vld [vmem:[#allocation9] sm:$0xff]
    %v84 = vld [vmem:[#allocation9 + $0x8] sm:$0xff]
    %v85 = vld [vmem:[#allocation9 + $0x10] sm:$0xff]
    %v86 = vld [vmem:[#allocation9 + $0x18] sm:$0xff]
    %v87 = vld [vmem:[#allocation9 + $0x20] sm:$0xff]
    %v88 = vld [vmem:[#allocation9 + $0x28] sm:$0xff]
    %v89 = vld [vmem:[#allocation9 + $0x30] sm:$0xff]
    %v90 = vld [vmem:[#allocation9 + $0x38] sm:$0xff]
    %v91 = vld [vmem:[#allocation9 + $0x40] sm:$0xff]
    %v92 = vld [vmem:[#allocation9 + $0x48] sm:$0xff]
    %v93 = vld [vmem:[#allocation9 + $0x50] sm:$0xff]
    %v94 = vld [vmem:[#allocation9 + $0x58] sm:$0xff]
    %v95 = vld [vmem:[#allocation9 + $0x60] sm:$0xff]
    %v96 = vld [vmem:[#allocation9 + $0x68] sm:$0xff]
    %v97 = vld [vmem:[#allocation9 + $0x70] sm:$0xff]
    %v98 = vld [vmem:[#allocation9 + $0x78] sm:$0xff]
    %v99 = vld [vmem:[#allocation9 + $0x80] sm:$0xff]
    %v100 = vld [vmem:[#allocation9 + $0x88] sm:$0xff]
    %v101 = vld [vmem:[#allocation9 + $0x90] sm:$0xff]
    %v102 = vld [vmem:[#allocation9 + $0x98] sm:$0xff]
    %v103 = vld [vmem:[#allocation9 + $0xa0] sm:$0xff]
    %v104 = vld [vmem:[#allocation9 + $0xa8] sm:$0xff]
    %v105 = vld [vmem:[#allocation9 + $0xb0] sm:$0xff]
    %v106 = vld [vmem:[#allocation9 + $0xb8] sm:$0xff]
    %v107 = vld [vmem:[#allocation9 + $0xc0] sm:$0xff]
    %v108 = vld [vmem:[#allocation9 + $0xc8] sm:$0xff]
    %v109 = vld [vmem:[#allocation9 + $0xd0] sm:$0xff]
    %v110 = vld [vmem:[#allocation9 + $0xd8] sm:$0xff]
    %v111 = vld [vmem:[#allocation9 + $0xe0] sm:$0xff]
    %v112 = vld [vmem:[#allocation9 + $0xe8] sm:$0xff]
    %v113 = vld [vmem:[#allocation9 + $0xf0] sm:$0xff]
    %v114 = vld [vmem:[#allocation9 + $0xf8] sm:$0xff]
    %v115 = vld [vmem:[%s4] sm:$0xf]
    %v117 = vlaneseq
    %v118 = vshrl.u32 %v117, 7
    %v119 = vsub.s32 0, %v118
    %v120 = vrot.slane %v115, %v119
    %v121 = vlaneseq
    %v122 = vshrl.u32 %v121, 7
    %v123 = vsub.s32 1, %v122
    %v124 = vrot.slane %v115, %v123
    %v125 = vlaneseq
    %v126 = vshrl.u32 %v125, 7
    %v127 = vsub.s32 2, %v126
    %v128 = vrot.slane %v115, %v127
    %v129 = vlaneseq
    %v130 = vshrl.u32 %v129, 7
    %v131 = vsub.s32 3, %v130
    %v132 = vrot.slane %v115, %v131
    %v145 = vunpack.c.l.b16 %v75
    %v146 = vunpack.c.l.b16 %v76
    %v147 = vunpack.c.l.b16 %v77
    %v148 = vunpack.c.l.b16 %v78
    %v149 = vunpack.c.l.b16 %v79
    %v150 = vunpack.c.l.b16 %v80
    %v151 = vunpack.c.l.b16 %v81
    %v152 = vunpack.c.l.b16 %v82
    %v153 = vpack.c.b16 %v146, %v145
    %v154 = vpack.c.b16 %v148, %v147
    %v155 = vpack.c.b16 %v150, %v149
    %v156 = vpack.c.b16 %v152, %v151
    %v193 = vunpack.c.l.b16 %v83
    %v194 = vunpack.c.h.b16 %v83
    %v195 = vunpack.c.l.b16 %v84
    %v196 = vunpack.c.h.b16 %v84
    %v197 = vunpack.c.l.b16 %v85
    %v198 = vunpack.c.h.b16 %v85
    %v199 = vunpack.c.l.b16 %v86
    %v200 = vunpack.c.h.b16 %v86
    %v201 = vunpack.c.l.b16 %v87
    %v202 = vunpack.c.h.b16 %v87
    %v203 = vunpack.c.l.b16 %v88
    %v204 = vunpack.c.h.b16 %v88
    %v205 = vunpack.c.l.b16 %v89
    %v206 = vunpack.c.h.b16 %v89
    %v207 = vunpack.c.l.b16 %v90
    %v208 = vunpack.c.h.b16 %v90
    %v209 = vunpack.c.l.b16 %v91
    %v210 = vunpack.c.h.b16 %v91
    %v211 = vunpack.c.l.b16 %v92
    %v212 = vunpack.c.h.b16 %v92
    %v213 = vunpack.c.l.b16 %v93
    %v214 = vunpack.c.h.b16 %v93
    %v215 = vunpack.c.l.b16 %v94
    %v216 = vunpack.c.h.b16 %v94
    %v217 = vunpack.c.l.b16 %v95
    %v218 = vunpack.c.h.b16 %v95
    %v219 = vunpack.c.l.b16 %v96
    %v220 = vunpack.c.h.b16 %v96
    %v221 = vunpack.c.l.b16 %v97
    %v222 = vunpack.c.h.b16 %v97
    %v223 = vunpack.c.l.b16 %v98
    %v224 = vunpack.c.h.b16 %v98
    %v225 = vunpack.c.l.b16 %v99
    %v226 = vunpack.c.h.b16 %v99
    %v227 = vunpack.c.l.b16 %v100
    %v228 = vunpack.c.h.b16 %v100
    %v229 = vunpack.c.l.b16 %v101
    %v230 = vunpack.c.h.b16 %v101
    %v231 = vunpack.c.l.b16 %v102
    %v232 = vunpack.c.h.b16 %v102
    %v233 = vunpack.c.l.b16 %v103
    %v234 = vunpack.c.h.b16 %v103
    %v235 = vunpack.c.l.b16 %v104
    %v236 = vunpack.c.h.b16 %v104
    %v237 = vunpack.c.l.b16 %v105
    %v238 = vunpack.c.h.b16 %v105
    %v239 = vunpack.c.l.b16 %v106
    %v240 = vunpack.c.h.b16 %v106
    %v241 = vunpack.c.l.b16 %v107
    %v242 = vunpack.c.h.b16 %v107
    %v243 = vunpack.c.l.b16 %v108
    %v244 = vunpack.c.h.b16 %v108
    %v245 = vunpack.c.l.b16 %v109
    %v246 = vunpack.c.h.b16 %v109
    %v247 = vunpack.c.l.b16 %v110
    %v248 = vunpack.c.h.b16 %v110
    %v249 = vunpack.c.l.b16 %v111
    %v250 = vunpack.c.h.b16 %v111
    %v251 = vunpack.c.l.b16 %v112
    %v252 = vunpack.c.h.b16 %v112
    %v253 = vunpack.c.l.b16 %v113
    %v254 = vunpack.c.h.b16 %v113
    %v255 = vunpack.c.l.b16 %v114
    %v256 = vunpack.c.h.b16 %v114
    %v257 = vpack.c.b16 %v197, %v193
    %v258 = vpack.c.b16 %v198, %v194
    %v259 = vpack.c.b16 %v199, %v195
    %v260 = vpack.c.b16 %v200, %v196
    %v261 = vpack.c.b16 %v205, %v201
    %v262 = vpack.c.b16 %v206, %v202
    %v263 = vpack.c.b16 %v207, %v203
    %v264 = vpack.c.b16 %v208, %v204
    %v265 = vpack.c.b16 %v213, %v209
    %v266 = vpack.c.b16 %v214, %v210
    %v267 = vpack.c.b16 %v215, %v211
    %v268 = vpack.c.b16 %v216, %v212
    %v269 = vpack.c.b16 %v221, %v217
    %v270 = vpack.c.b16 %v222, %v218
    %v271 = vpack.c.b16 %v223, %v219
    %v272 = vpack.c.b16 %v224, %v220
    %v273 = vpack.c.b16 %v229, %v225
    %v274 = vpack.c.b16 %v230, %v226
    %v275 = vpack.c.b16 %v231, %v227
    %v276 = vpack.c.b16 %v232, %v228
    %v277 = vpack.c.b16 %v237, %v233
    %v278 = vpack.c.b16 %v238, %v234
    %v279 = vpack.c.b16 %v239, %v235
    %v280 = vpack.c.b16 %v240, %v236
    %v281 = vpack.c.b16 %v245, %v241
    %v282 = vpack.c.b16 %v246, %v242
    %v283 = vpack.c.b16 %v247, %v243
    %v284 = vpack.c.b16 %v248, %v244
    %v285 = vpack.c.b16 %v253, %v249
    %v286 = vpack.c.b16 %v254, %v250
    %v287 = vpack.c.b16 %v255, %v251
    %v288 = vpack.c.b16 %v256, %v252
    %321 = vmatprep.subr.bf16.mxu0 %v258
    %322 = vmatpush1.bf16.msra.mxu0 %v257
    %323 = vmatprep.subr.bf16.mxu0 %v262
    %324 = vmatpush1.bf16.msra.mxu0 %v261
    %325 = vmatprep.subr.bf16.mxu0 %v266
    %326 = vmatpush1.bf16.msra.mxu0 %v265
    %327 = vmatprep.subr.bf16.mxu0 %v270
    %328 = vmatpush1.bf16.msra.mxu0 %v269
    %329 = vmatprep.subr.bf16.mxu0 %v274
    %330 = vmatpush1.bf16.msra.mxu0 %v273
    %331 = vmatprep.subr.bf16.mxu0 %v278
    %332 = vmatpush1.bf16.msra.mxu0 %v277
    %333 = vmatprep.subr.bf16.mxu0 %v282
    %334 = vmatpush1.bf16.msra.mxu0 %v281
    %335 = vmatprep.subr.bf16.mxu0 %v286
    %336 = vmatpush1.bf16.msra.mxu0 %v285
    %337 = vmatprep.subr.bf16.mxu0 0
    %338 = vmatpush1.bf16.msra.mxu0 0
    %339 = vmatprep.subr.bf16.mxu0 0
    %340 = vmatpush1.bf16.msra.mxu0 0
    %341 = vmatprep.subr.bf16.mxu0 0
    %342 = vmatpush1.bf16.msra.mxu0 0
    %343 = vmatprep.subr.bf16.mxu0 0
    %344 = vmatpush1.bf16.msra.mxu0 0
    %345 = vmatprep.subr.bf16.mxu0 0
    %346 = vmatpush1.bf16.msra.mxu0 0
    %347 = vmatprep.subr.bf16.mxu0 0
    %348 = vmatpush1.bf16.msra.mxu0 0
    %349 = vmatprep.subr.bf16.mxu0 0
    %350 = vmatpush1.bf16.msra.mxu0 0
    %351 = vmatprep.subr.bf16.mxu0 0
    %352 = vmatpush1.bf16.msra.mxu0 0
    %353 = vmatprep.mubr.bf16.mxu0 0
    %354 = vmatmul.mubr.bf16.gmra.mrb[0].mxu0 %v153
    %v355 = vpop.f32.mrb[0].mxu0
    %v356 = vadd.f32 %v120, %v355
    %v357 = vpop.f32.mrb[0].mxu0
    %v358 = vadd.f32 %v124, %v357
    %v359 = vpop.f32.mrb[0].mxu0
    %v360 = vadd.f32 %v120, %v359
    %v361 = vpop.f32.mrb[0].mxu0
    %v362 = vadd.f32 %v124, %v361
    %363 = vmatprep.mubr.bf16.mxu0 0
    %364 = vmatmul.mubr.bf16.gmra.mrb[0].mxu0 %v154
    %v365 = vpop.f32.mrb[0].mxu0
    %v366 = vadd.f32 %v120, %v365
    %v367 = vpop.f32.mrb[0].mxu0
    %v368 = vadd.f32 %v124, %v367
    %v369 = vpop.f32.mrb[0].mxu0
    %v370 = vadd.f32 %v120, %v369
    %v371 = vpop.f32.mrb[0].mxu0
    %v372 = vadd.f32 %v124, %v371
    %373 = vmatprep.mubr.bf16.mxu0 0
    %374 = vmatmul.mubr.bf16.gmra.mrb[0].mxu0 %v155
    %v375 = vpop.f32.mrb[0].mxu0
    %v376 = vadd.f32 %v120, %v375
    %v377 = vpop.f32.mrb[0].mxu0
    %v378 = vadd.f32 %v124, %v377
    %v379 = vpop.f32.mrb[0].mxu0
    %v380 = vadd.f32 %v120, %v379
    %v381 = vpop.f32.mrb[0].mxu0
    %v382 = vadd.f32 %v124, %v381
    %383 = vmatprep.mubr.bf16.mxu0 0
    %384 = vmatmul.mubr.bf16.gmra.mrb[0].mxu0 %v156
    %v385 = vpop.f32.mrb[0].mxu0
    %v386 = vadd.f32 %v120, %v385
    %v387 = vpop.f32.mrb[0].mxu0
    %v388 = vadd.f32 %v124, %v387
    %v389 = vpop.f32.mrb[0].mxu0
    %v390 = vadd.f32 %v120, %v389
    %v391 = vpop.f32.mrb[0].mxu0
    %v392 = vadd.f32 %v124, %v391
    %393 = vdwg.mxu0
    %394 = vmatprep.subr.bf16.mxu0 %v260
    %395 = vmatpush1.bf16.msra.mxu0 %v259
    %396 = vmatprep.subr.bf16.mxu0 %v264
    %397 = vmatpush1.bf16.msra.mxu0 %v263
    %398 = vmatprep.subr.bf16.mxu0 %v268
    %399 = vmatpush1.bf16.msra.mxu0 %v267
    %400 = vmatprep.subr.bf16.mxu0 %v272
    %401 = vmatpush1.bf16.msra.mxu0 %v271
    %402 = vmatprep.subr.bf16.mxu0 %v276
    %403 = vmatpush1.bf16.msra.mxu0 %v275
    %404 = vmatprep.subr.bf16.mxu0 %v280
    %405 = vmatpush1.bf16.msra.mxu0 %v279
    %406 = vmatprep.subr.bf16.mxu0 %v284
    %407 = vmatpush1.bf16.msra.mxu0 %v283
    %408 = vmatprep.subr.bf16.mxu0 %v288
    %409 = vmatpush1.bf16.msra.mxu0 %v287
    %410 = vmatprep.subr.bf16.mxu0 0
    %411 = vmatpush1.bf16.msra.mxu0 0
    %412 = vmatprep.subr.bf16.mxu0 0
    %413 = vmatpush1.bf16.msra.mxu0 0
    %414 = vmatprep.subr.bf16.mxu0 0
    %415 = vmatpush1.bf16.msra.mxu0 0
    %416 = vmatprep.subr.bf16.mxu0 0
    %417 = vmatpush1.bf16.msra.mxu0 0
    %418 = vmatprep.subr.bf16.mxu0 0
    %419 = vmatpush1.bf16.msra.mxu0 0
    %420 = vmatprep.subr.bf16.mxu0 0
    %421 = vmatpush1.bf16.msra.mxu0 0
    %422 = vmatprep.subr.bf16.mxu0 0
    %423 = vmatpush1.bf16.msra.mxu0 0
    %424 = vmatprep.subr.bf16.mxu0 0
    %425 = vmatpush1.bf16.msra.mxu0 0
    %426 = vmatprep.mubr.bf16.mxu0 0
    %427 = vmatmul.mubr.bf16.gmra.mrb[0].mxu0 %v153
    %v428 = vpop.f32.mrb[0].mxu0
    %v429 = vadd.f32 %v128, %v428
    %v430 = vpop.f32.mrb[0].mxu0
    %v431 = vadd.f32 %v132, %v430
    %v432 = vpop.f32.mrb[0].mxu0
    %v433 = vadd.f32 %v128, %v432
    %v434 = vpop.f32.mrb[0].mxu0
    %v435 = vadd.f32 %v132, %v434
    %436 = vmatprep.mubr.bf16.mxu0 0
    %437 = vmatmul.mubr.bf16.gmra.mrb[0].mxu0 %v154
    %v438 = vpop.f32.mrb[0].mxu0
    %v439 = vadd.f32 %v128, %v438
    %v440 = vpop.f32.mrb[0].mxu0
    %v441 = vadd.f32 %v132, %v440
    %v442 = vpop.f32.mrb[0].mxu0
    %v443 = vadd.f32 %v128, %v442
    %v444 = vpop.f32.mrb[0].mxu0
    %v445 = vadd.f32 %v132, %v444
    %446 = vmatprep.mubr.bf16.mxu0 0
    %447 = vmatmul.mubr.bf16.gmra.mrb[0].mxu0 %v155
    %v448 = vpop.f32.mrb[0].mxu0
    %v449 = vadd.f32 %v128, %v448
    %v450 = vpop.f32.mrb[0].mxu0
    %v451 = vadd.f32 %v132, %v450
    %v452 = vpop.f32.mrb[0].mxu0
    %v453 = vadd.f32 %v128, %v452
    %v454 = vpop.f32.mrb[0].mxu0
    %v455 = vadd.f32 %v132, %v454
    %456 = vmatprep.mubr.bf16.mxu0 0
    %457 = vmatmul.mubr.bf16.gmra.mrb[0].mxu0 %v156
    %v458 = vpop.f32.mrb[0].mxu0
    %v459 = vadd.f32 %v128, %v458
    %v460 = vpop.f32.mrb[0].mxu0
    %v461 = vadd.f32 %v132, %v460
    %v462 = vpop.f32.mrb[0].mxu0
    %v463 = vadd.f32 %v128, %v462
    %v464 = vpop.f32.mrb[0].mxu0
    %v465 = vadd.f32 %v132, %v464
    %466 = vdwg.mxu0
    %467 = vst [vmem:[#allocation4] sm:$0xff] %v356
    %468 = vst [vmem:[#allocation4 + $0x8] sm:$0xff] %v358
    %469 = vst [vmem:[#allocation4 + $0x10] sm:$0xff] %v429
    %470 = vst [vmem:[#allocation4 + $0x18] sm:$0xff] %v431
    %471 = vst [vmem:[#allocation4 + $0x20] sm:$0xff] %v360
    %472 = vst [vmem:[#allocation4 + $0x28] sm:$0xff] %v362
    %473 = vst [vmem:[#allocation4 + $0x30] sm:$0xff] %v433
    %474 = vst [vmem:[#allocation4 + $0x38] sm:$0xff] %v435
    %475 = vst [vmem:[#allocation4 + $0x40] sm:$0xff] %v366
    %476 = vst [vmem:[#allocation4 + $0x48] sm:$0xff] %v368
    %477 = vst [vmem:[#allocation4 + $0x50] sm:$0xff] %v439
    %478 = vst [vmem:[#allocation4 + $0x58] sm:$0xff] %v441
    %479 = vst [vmem:[#allocation4 + $0x60] sm:$0xff] %v370
    %480 = vst [vmem:[#allocation4 + $0x68] sm:$0xff] %v372
    %481 = vst [vmem:[#allocation4 + $0x70] sm:$0xff] %v443
    %482 = vst [vmem:[#allocation4 + $0x78] sm:$0xff] %v445
    %483 = vst [vmem:[#allocation4 + $0x80] sm:$0xff] %v376
    %484 = vst [vmem:[#allocation4 + $0x88] sm:$0xff] %v378
    %485 = vst [vmem:[#allocation4 + $0x90] sm:$0xff] %v449
    %486 = vst [vmem:[#allocation4 + $0x98] sm:$0xff] %v451
    %487 = vst [vmem:[#allocation4 + $0xa0] sm:$0xff] %v380
    %488 = vst [vmem:[#allocation4 + $0xa8] sm:$0xff] %v382
    %489 = vst [vmem:[#allocation4 + $0xb0] sm:$0xff] %v453
    %490 = vst [vmem:[#allocation4 + $0xb8] sm:$0xff] %v455
    %491 = vst [vmem:[#allocation4 + $0xc0] sm:$0xff] %v386
    %492 = vst [vmem:[#allocation4 + $0xc8] sm:$0xff] %v388
    %493 = vst [vmem:[#allocation4 + $0xd0] sm:$0xff] %v459
    %494 = vst [vmem:[#allocation4 + $0xd8] sm:$0xff] %v461
    %495 = vst [vmem:[#allocation4 + $0xe0] sm:$0xff] %v390
    %496 = vst [vmem:[#allocation4 + $0xe8] sm:$0xff] %v392
    %497 = vst [vmem:[#allocation4 + $0xf0] sm:$0xff] %v463
    %498 = vst [vmem:[#allocation4 + $0xf8] sm:$0xff] %v465
    %v499 = vld [vmem:[#allocation11] sm:$0xff]
    %v500 = vld [vmem:[#allocation11 + $0x8] sm:$0xff]
    %v501 = vld [vmem:[#allocation11 + $0x10] sm:$0xff]
    %v502 = vld [vmem:[#allocation11 + $0x18] sm:$0xff]
    %v503 = vld [vmem:[#allocation11 + $0x20] sm:$0xff]
    %v504 = vld [vmem:[#allocation11 + $0x28] sm:$0xff]
    %v505 = vld [vmem:[#allocation11 + $0x30] sm:$0xff]
    %v506 = vld [vmem:[#allocation11 + $0x38] sm:$0xff]
    %v507 = vld [vmem:[#allocation11 + $0x40] sm:$0xff]
    %v508 = vld [vmem:[#allocation11 + $0x48] sm:$0xff]
    %v509 = vld [vmem:[#allocation11 + $0x50] sm:$0xff]
    %v510 = vld [vmem:[#allocation11 + $0x58] sm:$0xff]
    %v511 = vld [vmem:[#allocation11 + $0x60] sm:$0xff]
    %v512 = vld [vmem:[#allocation11 + $0x68] sm:$0xff]
    %v513 = vld [vmem:[#allocation11 + $0x70] sm:$0xff]
    %v514 = vld [vmem:[#allocation11 + $0x78] sm:$0xff]
    %v515 = vld [vmem:[#allocation11 + $0x80] sm:$0xff]
    %v516 = vld [vmem:[#allocation11 + $0x88] sm:$0xff]
    %v517 = vld [vmem:[#allocation11 + $0x90] sm:$0xff]
    %v518 = vld [vmem:[#allocation11 + $0x98] sm:$0xff]
    %v519 = vld [vmem:[#allocation11 + $0xa0] sm:$0xff]
    %v520 = vld [vmem:[#allocation11 + $0xa8] sm:$0xff]
    %v521 = vld [vmem:[#allocation11 + $0xb0] sm:$0xff]
    %v522 = vld [vmem:[#allocation11 + $0xb8] sm:$0xff]
    %v523 = vld [vmem:[#allocation11 + $0xc0] sm:$0xff]
    %v524 = vld [vmem:[#allocation11 + $0xc8] sm:$0xff]
    %v525 = vld [vmem:[#allocation11 + $0xd0] sm:$0xff]
    %v526 = vld [vmem:[#allocation11 + $0xd8] sm:$0xff]
    %v527 = vld [vmem:[#allocation11 + $0xe0] sm:$0xff]
    %v528 = vld [vmem:[#allocation11 + $0xe8] sm:$0xff]
    %v529 = vld [vmem:[#allocation11 + $0xf0] sm:$0xff]
    %v530 = vld [vmem:[#allocation11 + $0xf8] sm:$0xff]
    %v531 = vld [vmem:[#allocation11 + $0x100] sm:$0xff]
    %v532 = vld [vmem:[#allocation11 + $0x108] sm:$0xff]
    %v533 = vld [vmem:[#allocation11 + $0x110] sm:$0xff]
    %v534 = vld [vmem:[#allocation11 + $0x118] sm:$0xff]
    %v535 = vld [vmem:[#allocation11 + $0x120] sm:$0xff]
    %v536 = vld [vmem:[#allocation11 + $0x128] sm:$0xff]
    %v537 = vld [vmem:[#allocation11 + $0x130] sm:$0xff]
    %v538 = vld [vmem:[#allocation11 + $0x138] sm:$0xff]
    %v539 = vld [vmem:[#allocation11 + $0x140] sm:$0xff]
    %v540 = vld [vmem:[#allocation11 + $0x148] sm:$0xff]
    %v541 = vld [vmem:[#allocation11 + $0x150] sm:$0xff]
    %v542 = vld [vmem:[#allocation11 + $0x158] sm:$0xff]
    %v543 = vld [vmem:[#allocation11 + $0x160] sm:$0xff]
    %v544 = vld [vmem:[#allocation11 + $0x168] sm:$0xff]
    %v545 = vld [vmem:[#allocation11 + $0x170] sm:$0xff]
    %v546 = vld [vmem:[#allocation11 + $0x178] sm:$0xff]
    %v547 = vld [vmem:[#allocation11 + $0x180] sm:$0xff]
    %v548 = vld [vmem:[#allocation11 + $0x188] sm:$0xff]
    %v549 = vld [vmem:[#allocation11 + $0x190] sm:$0xff]
    %v550 = vld [vmem:[#allocation11 + $0x198] sm:$0xff]
    %v551 = vld [vmem:[#allocation11 + $0x1a0] sm:$0xff]
    %v552 = vld [vmem:[#allocation11 + $0x1a8] sm:$0xff]
    %v553 = vld [vmem:[#allocation11 + $0x1b0] sm:$0xff]
    %v554 = vld [vmem:[#allocation11 + $0x1b8] sm:$0xff]
    %v555 = vld [vmem:[#allocation11 + $0x1c0] sm:$0xff]
    %v556 = vld [vmem:[#allocation11 + $0x1c8] sm:$0xff]
    %v557 = vld [vmem:[#allocation11 + $0x1d0] sm:$0xff]
    %v558 = vld [vmem:[#allocation11 + $0x1d8] sm:$0xff]
    %v559 = vld [vmem:[#allocation11 + $0x1e0] sm:$0xff]
    %v560 = vld [vmem:[#allocation11 + $0x1e8] sm:$0xff]
    %v561 = vld [vmem:[#allocation11 + $0x1f0] sm:$0xff]
    %v562 = vld [vmem:[#allocation11 + $0x1f8] sm:$0xff]
    %v563 = vld [vmem:[#allocation2] sm:$0xff]
    %v564 = vld [vmem:[#allocation3] sm:$0xff]
    %v565 = vld [vmem:[#allocation4] sm:$0xff]
    %v566 = vld [vmem:[#allocation4 + $0x8] sm:$0xff]
    %v567 = vld [vmem:[#allocation4 + $0x10] sm:$0xff]
    %v568 = vld [vmem:[#allocation4 + $0x18] sm:$0xff]
    %569 = vmatprep.subr.mxu0 %v500
    %570 = vmatpush1.msra.mxu0 %v499
    %571 = vmatprep.subr.mxu0 %v504
    %572 = vmatpush1.msra.mxu0 %v503
    %573 = vmatprep.subr.mxu0 %v508
    %574 = vmatpush1.msra.mxu0 %v507
    %575 = vmatprep.subr.mxu0 %v512
    %576 = vmatpush1.msra.mxu0 %v511
    %577 = vmatprep.subr.mxu0 %v516
    %578 = vmatpush1.msra.mxu0 %v515
    %579 = vmatprep.subr.mxu0 %v520
    %580 = vmatpush1.msra.mxu0 %v519
    %581 = vmatprep.subr.mxu0 %v524
    %582 = vmatpush1.msra.mxu0 %v523
    %583 = vmatprep.subr.mxu0 %v528
    %584 = vmatpush1.msra.mxu0 %v527
    %585 = vmatprep.subr.mxu0 %v532
    %586 = vmatpush1.msra.mxu0 %v531
    %587 = vmatprep.subr.mxu0 %v536
    %588 = vmatpush1.msra.mxu0 %v535
    %589 = vmatprep.subr.mxu0 %v540
    %590 = vmatpush1.msra.mxu0 %v539
    %591 = vmatprep.subr.mxu0 %v544
    %592 = vmatpush1.msra.mxu0 %v543
    %593 = vmatprep.subr.mxu0 %v548
    %594 = vmatpush1.msra.mxu0 %v547
    %595 = vmatprep.subr.mxu0 %v552
    %596 = vmatpush1.msra.mxu0 %v551
    %597 = vmatprep.subr.mxu0 %v556
    %598 = vmatpush1.msra.mxu0 %v555
    %599 = vmatprep.subr.mxu0 %v560
    %600 = vmatpush1.msra.mxu0 %v559
    %601 = vmatprep.subr.mxu0 0.0
    %602 = vmatpush1.msra.mxu0 0.0
    %603 = vmatprep.subr.mxu0 0.0
    %604 = vmatpush1.msra.mxu0 0.0
    %605 = vmatprep.subr.mxu0 0.0
    %606 = vmatpush1.msra.mxu0 0.0
    %607 = vmatprep.subr.mxu0 0.0
    %608 = vmatpush1.msra.mxu0 0.0
    %609 = vmatprep.subr.mxu0 0.0
    %610 = vmatpush1.msra.mxu0 0.0
    %611 = vmatprep.subr.mxu0 0.0
    %612 = vmatpush1.msra.mxu0 0.0
    %613 = vmatprep.subr.mxu0 0.0
    %614 = vmatpush1.msra.mxu0 0.0
    %615 = vmatprep.subr.mxu0 0.0
    %616 = vmatpush1.msra.mxu0 0.0
    %617 = vmatprep.subr.mxu0 0.0
    %618 = vmatpush1.msra.mxu0 0.0
    %619 = vmatprep.subr.mxu0 0.0
    %620 = vmatpush1.msra.mxu0 0.0
    %621 = vmatprep.subr.mxu0 0.0
    %622 = vmatpush1.msra.mxu0 0.0
    %623 = vmatprep.subr.mxu0 0.0
    %624 = vmatpush1.msra.mxu0 0.0
    %625 = vmatprep.subr.mxu0 0.0
    %626 = vmatpush1.msra.mxu0 0.0
    %627 = vmatprep.subr.mxu0 0.0
    %628 = vmatpush1.msra.mxu0 0.0
    %629 = vmatprep.subr.mxu0 0.0
    %630 = vmatpush1.msra.mxu0 0.0
    %631 = vmatprep.subr.mxu0 0.0
    %632 = vmatpush1.msra.mxu0 0.0
    %633 = vmatprep.mubr.f32.mxu0 0.0
    %634 = vmatmul.mubr.f32.gmra.mrb[0].mxu0 %v563
    %v635 = vpop.f32.mrb[0].mxu0
    %v636 = vadd.f32 0.0, %v635
    %v637 = vpop.f32.mrb[0].mxu0
    %v638 = vadd.f32 0.0, %v637
    %639 = vdwg.mxu0
    %640 = vmatprep.subr.mxu0 %v502
    %641 = vmatpush1.msra.mxu0 %v501
    %642 = vmatprep.subr.mxu0 %v506
    %643 = vmatpush1.msra.mxu0 %v505
    %644 = vmatprep.subr.mxu0 %v510
    %645 = vmatpush1.msra.mxu0 %v509
    %646 = vmatprep.subr.mxu0 %v514
    %647 = vmatpush1.msra.mxu0 %v513
    %648 = vmatprep.subr.mxu0 %v518
    %649 = vmatpush1.msra.mxu0 %v517
    %650 = vmatprep.subr.mxu0 %v522
    %651 = vmatpush1.msra.mxu0 %v521
    %652 = vmatprep.subr.mxu0 %v526
    %653 = vmatpush1.msra.mxu0 %v525
    %654 = vmatprep.subr.mxu0 %v530
    %655 = vmatpush1.msra.mxu0 %v529
    %656 = vmatprep.subr.mxu0 %v534
    %657 = vmatpush1.msra.mxu0 %v533
    %658 = vmatprep.subr.mxu0 %v538
    %659 = vmatpush1.msra.mxu0 %v537
    %660 = vmatprep.subr.mxu0 %v542
    %661 = vmatpush1.msra.mxu0 %v541
    %662 = vmatprep.subr.mxu0 %v546
    %663 = vmatpush1.msra.mxu0 %v545
    %664 = vmatprep.subr.mxu0 %v550
    %665 = vmatpush1.msra.mxu0 %v549
    %666 = vmatprep.subr.mxu0 %v554
    %667 = vmatpush1.msra.mxu0 %v553
    %668 = vmatprep.subr.mxu0 %v558
    %669 = vmatpush1.msra.mxu0 %v557
    %670 = vmatprep.subr.mxu0 %v562
    %671 = vmatpush1.msra.mxu0 %v561
    %672 = vmatprep.subr.mxu0 0.0
    %673 = vmatpush1.msra.mxu0 0.0
    %674 = vmatprep.subr.mxu0 0.0
    %675 = vmatpush1.msra.mxu0 0.0
    %676 = vmatprep.subr.mxu0 0.0
    %677 = vmatpush1.msra.mxu0 0.0
    %678 = vmatprep.subr.mxu0 0.0
    %679 = vmatpush1.msra.mxu0 0.0
    %680 = vmatprep.subr.mxu0 0.0
    %681 = vmatpush1.msra.mxu0 0.0
    %682 = vmatprep.subr.mxu0 0.0
    %683 = vmatpush1.msra.mxu0 0.0
    %684 = vmatprep.subr.mxu0 0.0
    %685 = vmatpush1.msra.mxu0 0.0
    %686 = vmatprep.subr.mxu0 0.0
    %687 = vmatpush1.msra.mxu0 0.0
    %688 = vmatprep.subr.mxu0 0.0
    %689 = vmatpush1.msra.mxu0 0.0
    %690 = vmatprep.subr.mxu0 0.0
    %691 = vmatpush1.msra.mxu0 0.0
    %692 = vmatprep.subr.mxu0 0.0
    %693 = vmatpush1.msra.mxu0 0.0
    %694 = vmatprep.subr.mxu0 0.0
    %695 = vmatpush1.msra.mxu0 0.0
    %696 = vmatprep.subr.mxu0 0.0
    %697 = vmatpush1.msra.mxu0 0.0
    %698 = vmatprep.subr.mxu0 0.0
    %699 = vmatpush1.msra.mxu0 0.0
    %700 = vmatprep.subr.mxu0 0.0
    %701 = vmatpush1.msra.mxu0 0.0
    %702 = vmatprep.subr.mxu0 0.0
    %703 = vmatpush1.msra.mxu0 0.0
    %704 = vmatprep.mubr.f32.mxu0 0.0
    %705 = vmatmul.mubr.f32.gmra.mrb[0].mxu0 %v563
    %v706 = vpop.f32.mrb[0].mxu0
    %v707 = vadd.f32 0.0, %v706
    %v708 = vpop.f32.mrb[0].mxu0
    %v709 = vadd.f32 0.0, %v708
    %710 = vdwg.mxu0
    %v711 = vadd.f32 %v565, %v636
    %v712 = vadd.f32 %v566, %v638
    %v713 = vadd.f32 %v567, %v707
    %v714 = vadd.f32 %v568, %v709
    %v715 = vxor.u32 %v711, 2147483648
    %v716 = vxor.u32 %v712, 2147483648
    %v717 = vxor.u32 %v713, 2147483648
    %v718 = vmul.f32 %v715, 1.442695
    %v719 = vpow.pop %v718
    %v720 = vmul.f32 %v716, 1.442695
    %v721 = vpow.pop %v720
    %v722 = vmul.f32 %v717, 1.442695
    %v723 = vpow.pop %v722
    %v724 = vadd.f32 %v719, 1.0
    %v725 = vadd.f32 %v721, 1.0
    %v726 = vadd.f32 %v723, 1.0
    %v727 = vrcp.pop %v724
    %v728 = vmul.f32 1.0, %v727
    %v729 = vrcp.pop %v725
    %v730 = vmul.f32 1.0, %v729
    %v731 = vrcp.pop %v726
    %v732 = vmul.f32 1.0, %v731
    %v733 = vtanh.pop %v714
    %v734 = vmul.f32 %v730, %v564
    %v735 = vmul.f32 %v728, %v733
    %v736 = vadd.f32 %v734, %v735
    %v737 = vtanh.pop %v736
    %v738 = vmul.f32 %v732, %v737
    %v739 = vld [vmem:[%s1] sm:$0xff]
    %vm740 = vcmp.gt.f32.partialorder %v739, 0.0
    %v741 = vsel %vm740, 1, 0
    %742 = vset.pattern.permute.xlu0 0
    %743 = vperm.xlu0 %742, %v741
    %v744 = vpop.permute.xlu0 %743
    %vm745 = vcmp.eq.s32.totalorder %v744, 1
    %v746 = vsel %vm745, %v738, 0.0
    %v747 = vpack.c.bf16 %v746, %v746
    %748 = vst [vmem:[#allocation5] sm:$0xf] %v747
    %s749 = scalar_lea.vmem [#allocation4], 32
    %v750 = vld [vmem:[%s749] sm:$0xff]
    %v751 = vld [vmem:[%s749 + $0x8] sm:$0xff]
    %v752 = vld [vmem:[%s749 + $0x10] sm:$0xff]
    %v753 = vld [vmem:[%s749 + $0x18] sm:$0xff]
    %754 = vmatprep.subr.mxu0 %v500
    %755 = vmatpush1.msra.mxu0 %v499
    %756 = vmatprep.subr.mxu0 %v504
    %757 = vmatpush1.msra.mxu0 %v503
    %758 = vmatprep.subr.mxu0 %v508
    %759 = vmatpush1.msra.mxu0 %v507
    %760 = vmatprep.subr.mxu0 %v512
    %761 = vmatpush1.msra.mxu0 %v511
    %762 = vmatprep.subr.mxu0 %v516
    %763 = vmatpush1.msra.mxu0 %v515
    %764 = vmatprep.subr.mxu0 %v520
    %765 = vmatpush1.msra.mxu0 %v519
    %766 = vmatprep.subr.mxu0 %v524
    %767 = vmatpush1.msra.mxu0 %v523
    %768 = vmatprep.subr.mxu0 %v528
    %769 = vmatpush1.msra.mxu0 %v527
    %770 = vmatprep.subr.mxu0 %v532
    %771 = vmatpush1.msra.mxu0 %v531
    %772 = vmatprep.subr.mxu0 %v536
    %773 = vmatpush1.msra.mxu0 %v535
    %774 = vmatprep.subr.mxu0 %v540
    %775 = vmatpush1.msra.mxu0 %v539
    %776 = vmatprep.subr.mxu0 %v544
    %777 = vmatpush1.msra.mxu0 %v543
    %778 = vmatprep.subr.mxu0 %v548
    %779 = vmatpush1.msra.mxu0 %v547
    %780 = vmatprep.subr.mxu0 %v552
    %781 = vmatpush1.msra.mxu0 %v551
    %782 = vmatprep.subr.mxu0 %v556
    %783 = vmatpush1.msra.mxu0 %v555
    %784 = vmatprep.subr.mxu0 %v560
    %785 = vmatpush1.msra.mxu0 %v559
    %786 = vmatprep.subr.mxu0 0.0
    %787 = vmatpush1.msra.mxu0 0.0
    %788 = vmatprep.subr.mxu0 0.0
    %789 = vmatpush1.msra.mxu0 0.0
    %790 = vmatprep.subr.mxu0 0.0
    %791 = vmatpush1.msra.mxu0 0.0
    %792 = vmatprep.subr.mxu0 0.0
    %793 = vmatpush1.msra.mxu0 0.0
    %794 = vmatprep.subr.mxu0 0.0
    %795 = vmatpush1.msra.mxu0 0.0
    %796 = vmatprep.subr.mxu0 0.0
    %797 = vmatpush1.msra.mxu0 0.0
    %798 = vmatprep.subr.mxu0 0.0
    %799 = vmatpush1.msra.mxu0 0.0
    %800 = vmatprep.subr.mxu0 0.0
    %801 = vmatpush1.msra.mxu0 0.0
    %802 = vmatprep.subr.mxu0 0.0
    %803 = vmatpush1.msra.mxu0 0.0
    %804 = vmatprep.subr.mxu0 0.0
    %805 = vmatpush1.msra.mxu0 0.0
    %806 = vmatprep.subr.mxu0 0.0
    %807 = vmatpush1.msra.mxu0 0.0
    %808 = vmatprep.subr.mxu0 0.0
    %809 = vmatpush1.msra.mxu0 0.0
    %810 = vmatprep.subr.mxu0 0.0
    %811 = vmatpush1.msra.mxu0 0.0
    %812 = vmatprep.subr.mxu0 0.0
    %813 = vmatpush1.msra.mxu0 0.0
    %814 = vmatprep.subr.mxu0 0.0
    %815 = vmatpush1.msra.mxu0 0.0
    %816 = vmatprep.subr.mxu0 0.0
    %817 = vmatpush1.msra.mxu0 0.0
    %818 = vmatprep.mubr.f32.mxu0 0.0
    %819 = vmatmul.mubr.f32.gmra.mrb[0].mxu0 %v738
    %v820 = vpop.f32.mrb[0].mxu0
    %v821 = vadd.f32 0.0, %v820
    %v822 = vpop.f32.mrb[0].mxu0
    %v823 = vadd.f32 0.0, %v822
    %824 = vdwg.mxu0
    %825 = vmatprep.subr.mxu0 %v502
    %826 = vmatpush1.msra.mxu0 %v501
    %827 = vmatprep.subr.mxu0 %v506
    %828 = vmatpush1.msra.mxu0 %v505
    %829 = vmatprep.subr.mxu0 %v510
    %830 = vmatpush1.msra.mxu0 %v509
    %831 = vmatprep.subr.mxu0 %v514
    %832 = vmatpush1.msra.mxu0 %v513
    %833 = vmatprep.subr.mxu0 %v518
    %834 = vmatpush1.msra.mxu0 %v517
    %835 = vmatprep.subr.mxu0 %v522
    %836 = vmatpush1.msra.mxu0 %v521
    %837 = vmatprep.subr.mxu0 %v526
    %838 = vmatpush1.msra.mxu0 %v525
    %839 = vmatprep.subr.mxu0 %v530
    %840 = vmatpush1.msra.mxu0 %v529
    %841 = vmatprep.subr.mxu0 %v534
    %842 = vmatpush1.msra.mxu0 %v533
    %843 = vmatprep.subr.mxu0 %v538
    %844 = vmatpush1.msra.mxu0 %v537
    %845 = vmatprep.subr.mxu0 %v542
    %846 = vmatpush1.msra.mxu0 %v541
    %847 = vmatprep.subr.mxu0 %v546
    %848 = vmatpush1.msra.mxu0 %v545
    %849 = vmatprep.subr.mxu0 %v550
    %850 = vmatpush1.msra.mxu0 %v549
    %851 = vmatprep.subr.mxu0 %v554
    %852 = vmatpush1.msra.mxu0 %v553
    %853 = vmatprep.subr.mxu0 %v558
    %854 = vmatpush1.msra.mxu0 %v557
    %855 = vmatprep.subr.mxu0 %v562
    %856 = vmatpush1.msra.mxu0 %v561
    %857 = vmatprep.subr.mxu0 0.0
    %858 = vmatpush1.msra.mxu0 0.0
    %859 = vmatprep.subr.mxu0 0.0
    %860 = vmatpush1.msra.mxu0 0.0
    %861 = vmatprep.subr.mxu0 0.0
    %862 = vmatpush1.msra.mxu0 0.0
    %863 = vmatprep.subr.mxu0 0.0
    %864 = vmatpush1.msra.mxu0 0.0
    %865 = vmatprep.subr.mxu0 0.0
    %866 = vmatpush1.msra.mxu0 0.0
    %867 = vmatprep.subr.mxu0 0.0
    %868 = vmatpush1.msra.mxu0 0.0
    %869 = vmatprep.subr.mxu0 0.0
    %870 = vmatpush1.msra.mxu0 0.0
    %871 = vmatprep.subr.mxu0 0.0
    %872 = vmatpush1.msra.mxu0 0.0
    %873 = vmatprep.subr.mxu0 0.0
    %874 = vmatpush1.msra.mxu0 0.0
    %875 = vmatprep.subr.mxu0 0.0
    %876 = vmatpush1.msra.mxu0 0.0
    %877 = vmatprep.subr.mxu0 0.0
    %878 = vmatpush1.msra.mxu0 0.0
    %879 = vmatprep.subr.mxu0 0.0
    %880 = vmatpush1.msra.mxu0 0.0
    %881 = vmatprep.subr.mxu0 0.0
    %882 = vmatpush1.msra.mxu0 0.0
    %883 = vmatprep.subr.mxu0 0.0
    %884 = vmatpush1.msra.mxu0 0.0
    %885 = vmatprep.subr.mxu0 0.0
    %886 = vmatpush1.msra.mxu0 0.0
    %887 = vmatprep.subr.mxu0 0.0
    %888 = vmatpush1.msra.mxu0 0.0
    %889 = vmatprep.mubr.f32.mxu0 0.0
    %890 = vmatmul.mubr.f32.gmra.mrb[0].mxu0 %v738
    %v891 = vpop.f32.mrb[0].mxu0
    %v892 = vadd.f32 0.0, %v891
    %v893 = vpop.f32.mrb[0].mxu0
    %v894 = vadd.f32 0.0, %v893
    %895 = vdwg.mxu0
    %v896 = vadd.f32 %v750, %v821
    %v897 = vadd.f32 %v751, %v823
    %v898 = vadd.f32 %v752, %v892
    %v899 = vadd.f32 %v753, %v894
    %v900 = vxor.u32 %v896, 2147483648
    %v901 = vxor.u32 %v897, 2147483648
    %v902 = vxor.u32 %v898, 2147483648
    %v903 = vmul.f32 %v900, 1.442695
    %v904 = vpow.pop %v903
    %v905 = vmul.f32 %v901, 1.442695
    %v906 = vpow.pop %v905
    %v907 = vmul.f32 %v902, 1.442695
    %v908 = vpow.pop %v907
    %v909 = vadd.f32 %v904, 1.0
    %v910 = vadd.f32 %v906, 1.0
    %v911 = vadd.f32 %v908, 1.0
    %v912 = vrcp.pop %v909
    %v913 = vmul.f32 1.0, %v912
    %v914 = vrcp.pop %v910
    %v915 = vmul.f32 1.0, %v914
    %v916 = vrcp.pop %v911
    %v917 = vmul.f32 1.0, %v916
    %v918 = vtanh.pop %v899
    %v919 = vmul.f32 %v915, %v736
    %v920 = vmul.f32 %v913, %v918
    %v921 = vadd.f32 %v919, %v920
    %v922 = vtanh.pop %v921
    %v923 = vmul.f32 %v917, %v922
    %s924 = scalar_lea.vmem %s1, 8
    %v925 = vld [vmem:[%s924] sm:$0xff]
    %vm926 = vcmp.gt.f32.partialorder %v925, 0.0
    %v927 = vsel %vm926, 1, 0
    %928 = vset.pattern.permute.xlu0 0
    %929 = vperm.xlu0 %928, %v927
    %v930 = vpop.permute.xlu0 %929
    %vm931 = vcmp.eq.s32.totalorder %v930, 1
    %v932 = vsel %vm931, %v923, 0.0
    %v933 = vpack.c.bf16 %v932, %v932
    %s934 = scalar_lea.vmem [#allocation5], 4
    %935 = vst [vmem:[%s934] sm:$0xf] %v933
    %s936 = scalar_lea.vmem [#allocation4], 64
    %v937 = vld [vmem:[%s936] sm:$0xff]
    %v938 = vld [vmem:[%s936 + $0x8] sm:$0xff]
    %v939 = vld [vmem:[%s936 + $0x10] sm:$0xff]
    %v940 = vld [vmem:[%s936 + $0x18] sm:$0xff]
    %941 = vmatprep.subr.mxu0 %v500
    %942 = vmatpush1.msra.mxu0 %v499
    %943 = vmatprep.subr.mxu0 %v504
    %944 = vmatpush1.msra.mxu0 %v503
    %945 = vmatprep.subr.mxu0 %v508
    %946 = vmatpush1.msra.mxu0 %v507
    %947 = vmatprep.subr.mxu0 %v512
    %948 = vmatpush1.msra.mxu0 %v511
    %949 = vmatprep.subr.mxu0 %v516
    %950 = vmatpush1.msra.mxu0 %v515
    %951 = vmatprep.subr.mxu0 %v520
    %952 = vmatpush1.msra.mxu0 %v519
    %953 = vmatprep.subr.mxu0 %v524
    %954 = vmatpush1.msra.mxu0 %v523
    %955 = vmatprep.subr.mxu0 %v528
    %956 = vmatpush1.msra.mxu0 %v527
    %957 = vmatprep.subr.mxu0 %v532
    %958 = vmatpush1.msra.mxu0 %v531
    %959 = vmatprep.subr.mxu0 %v536
    %960 = vmatpush1.msra.mxu0 %v535
    %961 = vmatprep.subr.mxu0 %v540
    %962 = vmatpush1.msra.mxu0 %v539
    %963 = vmatprep.subr.mxu0 %v544
    %964 = vmatpush1.msra.mxu0 %v543
    %965 = vmatprep.subr.mxu0 %v548
    %966 = vmatpush1.msra.mxu0 %v547
    %967 = vmatprep.subr.mxu0 %v552
    %968 = vmatpush1.msra.mxu0 %v551
    %969 = vmatprep.subr.mxu0 %v556
    %970 = vmatpush1.msra.mxu0 %v555
    %971 = vmatprep.subr.mxu0 %v560
    %972 = vmatpush1.msra.mxu0 %v559
    %973 = vmatprep.subr.mxu0 0.0
    %974 = vmatpush1.msra.mxu0 0.0
    %975 = vmatprep.subr.mxu0 0.0
    %976 = vmatpush1.msra.mxu0 0.0
    %977 = vmatprep.subr.mxu0 0.0
    %978 = vmatpush1.msra.mxu0 0.0
    %979 = vmatprep.subr.mxu0 0.0
    %980 = vmatpush1.msra.mxu0 0.0
    %981 = vmatprep.subr.mxu0 0.0
    %982 = vmatpush1.msra.mxu0 0.0
    %983 = vmatprep.subr.mxu0 0.0
    %984 = vmatpush1.msra.mxu0 0.0
    %985 = vmatprep.subr.mxu0 0.0
    %986 = vmatpush1.msra.mxu0 0.0
    %987 = vmatprep.subr.mxu0 0.0
    %988 = vmatpush1.msra.mxu0 0.0
    %989 = vmatprep.subr.mxu0 0.0
    %990 = vmatpush1.msra.mxu0 0.0
    %991 = vmatprep.subr.mxu0 0.0
    %992 = vmatpush1.msra.mxu0 0.0
    %993 = vmatprep.subr.mxu0 0.0
    %994 = vmatpush1.msra.mxu0 0.0
    %995 = vmatprep.subr.mxu0 0.0
    %996 = vmatpush1.msra.mxu0 0.0
    %997 = vmatprep.subr.mxu0 0.0
    %998 = vmatpush1.msra.mxu0 0.0
    %999 = vmatprep.subr.mxu0 0.0
    %1000 = vmatpush1.msra.mxu0 0.0
    %1001 = vmatprep.subr.mxu0 0.0
    %1002 = vmatpush1.msra.mxu0 0.0
    %1003 = vmatprep.subr.mxu0 0.0
    %1004 = vmatpush1.msra.mxu0 0.0
    %1005 = vmatprep.mubr.f32.mxu0 0.0
    %1006 = vmatmul.mubr.f32.gmra.mrb[0].mxu0 %v923
    %v1007 = vpop.f32.mrb[0].mxu0
    %v1008 = vadd.f32 0.0, %v1007
    %v1009 = vpop.f32.mrb[0].mxu0
    %v1010 = vadd.f32 0.0, %v1009
    %1011 = vdwg.mxu0
    %1012 = vmatprep.subr.mxu0 %v502
    %1013 = vmatpush1.msra.mxu0 %v501
    %1014 = vmatprep.subr.mxu0 %v506
    %1015 = vmatpush1.msra.mxu0 %v505
    %1016 = vmatprep.subr.mxu0 %v510
    %1017 = vmatpush1.msra.mxu0 %v509
    %1018 = vmatprep.subr.mxu0 %v514
    %1019 = vmatpush1.msra.mxu0 %v513
    %1020 = vmatprep.subr.mxu0 %v518
    %1021 = vmatpush1.msra.mxu0 %v517
    %1022 = vmatprep.subr.mxu0 %v522
    %1023 = vmatpush1.msra.mxu0 %v521
    %1024 = vmatprep.subr.mxu0 %v526
    %1025 = vmatpush1.msra.mxu0 %v525
    %1026 = vmatprep.subr.mxu0 %v530
    %1027 = vmatpush1.msra.mxu0 %v529
    %1028 = vmatprep.subr.mxu0 %v534
    %1029 = vmatpush1.msra.mxu0 %v533
    %1030 = vmatprep.subr.mxu0 %v538
    %1031 = vmatpush1.msra.mxu0 %v537
    %1032 = vmatprep.subr.mxu0 %v542
    %1033 = vmatpush1.msra.mxu0 %v541
    %1034 = vmatprep.subr.mxu0 %v546
    %1035 = vmatpush1.msra.mxu0 %v545
    %1036 = vmatprep.subr.mxu0 %v550
    %1037 = vmatpush1.msra.mxu0 %v549
    %1038 = vmatprep.subr.mxu0 %v554
    %1039 = vmatpush1.msra.mxu0 %v553
    %1040 = vmatprep.subr.mxu0 %v558
    %1041 = vmatpush1.msra.mxu0 %v557
    %1042 = vmatprep.subr.mxu0 %v562
    %1043 = vmatpush1.msra.mxu0 %v561
    %1044 = vmatprep.subr.mxu0 0.0
    %1045 = vmatpush1.msra.mxu0 0.0
    %1046 = vmatprep.subr.mxu0 0.0
    %1047 = vmatpush1.msra.mxu0 0.0
    %1048 = vmatprep.subr.mxu0 0.0
    %1049 = vmatpush1.msra.mxu0 0.0
    %1050 = vmatprep.subr.mxu0 0.0
    %1051 = vmatpush1.msra.mxu0 0.0
    %1052 = vmatprep.subr.mxu0 0.0
    %1053 = vmatpush1.msra.mxu0 0.0
    %1054 = vmatprep.subr.mxu0 0.0
    %1055 = vmatpush1.msra.mxu0 0.0
    %1056 = vmatprep.subr.mxu0 0.0
    %1057 = vmatpush1.msra.mxu0 0.0
    %1058 = vmatprep.subr.mxu0 0.0
    %1059 = vmatpush1.msra.mxu0 0.0
    %1060 = vmatprep.subr.mxu0 0.0
    %1061 = vmatpush1.msra.mxu0 0.0
    %1062 = vmatprep.subr.mxu0 0.0
    %1063 = vmatpush1.msra.mxu0 0.0
    %1064 = vmatprep.subr.mxu0 0.0
    %1065 = vmatpush1.msra.mxu0 0.0
    %1066 = vmatprep.subr.mxu0 0.0
    %1067 = vmatpush1.msra.mxu0 0.0
    %1068 = vmatprep.subr.mxu0 0.0
    %1069 = vmatpush1.msra.mxu0 0.0
    %1070 = vmatprep.subr.mxu0 0.0
    %1071 = vmatpush1.msra.mxu0 0.0
    %1072 = vmatprep.subr.mxu0 0.0
    %1073 = vmatpush1.msra.mxu0 0.0
    %1074 = vmatprep.subr.mxu0 0.0
    %1075 = vmatpush1.msra.mxu0 0.0
    %1076 = vmatprep.mubr.f32.mxu0 0.0
    %1077 = vmatmul.mubr.f32.gmra.mrb[0].mxu0 %v923
    %v1078 = vpop.f32.mrb[0].mxu0
    %v1079 = vadd.f32 0.0, %v1078
    %v1080 = vpop.f32.mrb[0].mxu0
    %v1081 = vadd.f32 0.0, %v1080
    %1082 = vdwg.mxu0
    %v1083 = vadd.f32 %v937, %v1008
    %v1084 = vadd.f32 %v938, %v1010
    %v1085 = vadd.f32 %v939, %v1079
    %v1086 = vadd.f32 %v940, %v1081
    %v1087 = vxor.u32 %v1083, 2147483648
    %v1088 = vxor.u32 %v1084, 2147483648
    %v1089 = vxor.u32 %v1085, 2147483648
    %v1090 = vmul.f32 %v1087, 1.442695
    %v1091 = vpow.pop %v1090
    %v1092 = vmul.f32 %v1088, 1.442695
    %v1093 = vpow.pop %v1092
    %v1094 = vmul.f32 %v1089, 1.442695
    %v1095 = vpow.pop %v1094
    %v1096 = vadd.f32 %v1091, 1.0
    %v1097 = vadd.f32 %v1093, 1.0
    %v1098 = vadd.f32 %v1095, 1.0
    %v1099 = vrcp.pop %v1096
    %v1100 = vmul.f32 1.0, %v1099
    %v1101 = vrcp.pop %v1097
    %v1102 = vmul.f32 1.0, %v1101
    %v1103 = vrcp.pop %v1098
    %v1104 = vmul.f32 1.0, %v1103
    %v1105 = vtanh.pop %v1086
    %v1106 = vmul.f32 %v1102, %v921
    %v1107 = vmul.f32 %v1100, %v1105
    %v1108 = vadd.f32 %v1106, %v1107
    %v1109 = vtanh.pop %v1108
    %v1110 = vmul.f32 %v1104, %v1109
    %s1111 = scalar_lea.vmem %s1, 16
    %v1112 = vld [vmem:[%s1111] sm:$0xff]
    %vm1113 = vcmp.gt.f32.partialorder %v1112, 0.0
    %v1114 = vsel %vm1113, 1, 0
    %1115 = vset.pattern.permute.xlu0 0
    %1116 = vperm.xlu0 %1115, %v1114
    %v1117 = vpop.permute.xlu0 %1116
    %vm1118 = vcmp.eq.s32.totalorder %v1117, 1
    %v1119 = vsel %vm1118, %v1110, 0.0
    %v1120 = vpack.c.bf16 %v1119, %v1119
    %s1121 = scalar_lea.vmem [#allocation5], 8
    %1122 = vst [vmem:[%s1121] sm:$0xf] %v1120
    %s1123 = scalar_lea.vmem [#allocation4], 96
    %v1124 = vld [vmem:[%s1123] sm:$0xff]
    %v1125 = vld [vmem:[%s1123 + $0x8] sm:$0xff]
    %v1126 = vld [vmem:[%s1123 + $0x10] sm:$0xff]
    %v1127 = vld [vmem:[%s1123 + $0x18] sm:$0xff]
    %1128 = vmatprep.subr.mxu0 %v500
    %1129 = vmatpush1.msra.mxu0 %v499
    %1130 = vmatprep.subr.mxu0 %v504
    %1131 = vmatpush1.msra.mxu0 %v503
    %1132 = vmatprep.subr.mxu0 %v508
    %1133 = vmatpush1.msra.mxu0 %v507
    %1134 = vmatprep.subr.mxu0 %v512
    %1135 = vmatpush1.msra.mxu0 %v511
    %1136 = vmatprep.subr.mxu0 %v516
    %1137 = vmatpush1.msra.mxu0 %v515
    %1138 = vmatprep.subr.mxu0 %v520
    %1139 = vmatpush1.msra.mxu0 %v519
    %1140 = vmatprep.subr.mxu0 %v524
    %1141 = vmatpush1.msra.mxu0 %v523
    %1142 = vmatprep.subr.mxu0 %v528
    %1143 = vmatpush1.msra.mxu0 %v527
    %1144 = vmatprep.subr.mxu0 %v532
    %1145 = vmatpush1.msra.mxu0 %v531
    %1146 = vmatprep.subr.mxu0 %v536
    %1147 = vmatpush1.msra.mxu0 %v535
    %1148 = vmatprep.subr.mxu0 %v540
    %1149 = vmatpush1.msra.mxu0 %v539
    %1150 = vmatprep.subr.mxu0 %v544
    %1151 = vmatpush1.msra.mxu0 %v543
    %1152 = vmatprep.subr.mxu0 %v548
    %1153 = vmatpush1.msra.mxu0 %v547
    %1154 = vmatprep.subr.mxu0 %v552
    %1155 = vmatpush1.msra.mxu0 %v551
    %1156 = vmatprep.subr.mxu0 %v556
    %1157 = vmatpush1.msra.mxu0 %v555
    %1158 = vmatprep.subr.mxu0 %v560
    %1159 = vmatpush1.msra.mxu0 %v559
    %1160 = vmatprep.subr.mxu0 0.0
    %1161 = vmatpush1.msra.mxu0 0.0
    %1162 = vmatprep.subr.mxu0 0.0
    %1163 = vmatpush1.msra.mxu0 0.0
    %1164 = vmatprep.subr.mxu0 0.0
    %1165 = vmatpush1.msra.mxu0 0.0
    %1166 = vmatprep.subr.mxu0 0.0
    %1167 = vmatpush1.msra.mxu0 0.0
    %1168 = vmatprep.subr.mxu0 0.0
    %1169 = vmatpush1.msra.mxu0 0.0
    %1170 = vmatprep.subr.mxu0 0.0
    %1171 = vmatpush1.msra.mxu0 0.0
    %1172 = vmatprep.subr.mxu0 0.0
    %1173 = vmatpush1.msra.mxu0 0.0
    %1174 = vmatprep.subr.mxu0 0.0
    %1175 = vmatpush1.msra.mxu0 0.0
    %1176 = vmatprep.subr.mxu0 0.0
    %1177 = vmatpush1.msra.mxu0 0.0
    %1178 = vmatprep.subr.mxu0 0.0
    %1179 = vmatpush1.msra.mxu0 0.0
    %1180 = vmatprep.subr.mxu0 0.0
    %1181 = vmatpush1.msra.mxu0 0.0
    %1182 = vmatprep.subr.mxu0 0.0
    %1183 = vmatpush1.msra.mxu0 0.0
    %1184 = vmatprep.subr.mxu0 0.0
    %1185 = vmatpush1.msra.mxu0 0.0
    %1186 = vmatprep.subr.mxu0 0.0
    %1187 = vmatpush1.msra.mxu0 0.0
    %1188 = vmatprep.subr.mxu0 0.0
    %1189 = vmatpush1.msra.mxu0 0.0
    %1190 = vmatprep.subr.mxu0 0.0
    %1191 = vmatpush1.msra.mxu0 0.0
    %1192 = vmatprep.mubr.f32.mxu0 0.0
    %1193 = vmatmul.mubr.f32.gmra.mrb[0].mxu0 %v1110
    %v1194 = vpop.f32.mrb[0].mxu0
    %v1195 = vadd.f32 0.0, %v1194
    %v1196 = vpop.f32.mrb[0].mxu0
    %v1197 = vadd.f32 0.0, %v1196
    %1198 = vdwg.mxu0
    %1199 = vmatprep.subr.mxu0 %v502
    %1200 = vmatpush1.msra.mxu0 %v501
    %1201 = vmatprep.subr.mxu0 %v506
    %1202 = vmatpush1.msra.mxu0 %v505
    %1203 = vmatprep.subr.mxu0 %v510
    %1204 = vmatpush1.msra.mxu0 %v509
    %1205 = vmatprep.subr.mxu0 %v514
    %1206 = vmatpush1.msra.mxu0 %v513
    %1207 = vmatprep.subr.mxu0 %v518
    %1208 = vmatpush1.msra.mxu0 %v517
    %1209 = vmatprep.subr.mxu0 %v522
    %1210 = vmatpush1.msra.mxu0 %v521
    %1211 = vmatprep.subr.mxu0 %v526
    %1212 = vmatpush1.msra.mxu0 %v525
    %1213 = vmatprep.subr.mxu0 %v530
    %1214 = vmatpush1.msra.mxu0 %v529
    %1215 = vmatprep.subr.mxu0 %v534
    %1216 = vmatpush1.msra.mxu0 %v533
    %1217 = vmatprep.subr.mxu0 %v538
    %1218 = vmatpush1.msra.mxu0 %v537
    %1219 = vmatprep.subr.mxu0 %v542
    %1220 = vmatpush1.msra.mxu0 %v541
    %1221 = vmatprep.subr.mxu0 %v546
    %1222 = vmatpush1.msra.mxu0 %v545
    %1223 = vmatprep.subr.mxu0 %v550
    %1224 = vmatpush1.msra.mxu0 %v549
    %1225 = vmatprep.subr.mxu0 %v554
    %1226 = vmatpush1.msra.mxu0 %v553
    %1227 = vmatprep.subr.mxu0 %v558
    %1228 = vmatpush1.msra.mxu0 %v557
    %1229 = vmatprep.subr.mxu0 %v562
    %1230 = vmatpush1.msra.mxu0 %v561
    %1231 = vmatprep.subr.mxu0 0.0
    %1232 = vmatpush1.msra.mxu0 0.0
    %1233 = vmatprep.subr.mxu0 0.0
    %1234 = vmatpush1.msra.mxu0 0.0
    %1235 = vmatprep.subr.mxu0 0.0
    %1236 = vmatpush1.msra.mxu0 0.0
    %1237 = vmatprep.subr.mxu0 0.0
    %1238 = vmatpush1.msra.mxu0 0.0
    %1239 = vmatprep.subr.mxu0 0.0
    %1240 = vmatpush1.msra.mxu0 0.0
    %1241 = vmatprep.subr.mxu0 0.0
    %1242 = vmatpush1.msra.mxu0 0.0
    %1243 = vmatprep.subr.mxu0 0.0
    %1244 = vmatpush1.msra.mxu0 0.0
    %1245 = vmatprep.subr.mxu0 0.0
    %1246 = vmatpush1.msra.mxu0 0.0
    %1247 = vmatprep.subr.mxu0 0.0
    %1248 = vmatpush1.msra.mxu0 0.0
    %1249 = vmatprep.subr.mxu0 0.0
    %1250 = vmatpush1.msra.mxu0 0.0
    %1251 = vmatprep.subr.mxu0 0.0
    %1252 = vmatpush1.msra.mxu0 0.0
    %1253 = vmatprep.subr.mxu0 0.0
    %1254 = vmatpush1.msra.mxu0 0.0
    %1255 = vmatprep.subr.mxu0 0.0
    %1256 = vmatpush1.msra.mxu0 0.0
    %1257 = vmatprep.subr.mxu0 0.0
    %1258 = vmatpush1.msra.mxu0 0.0
    %1259 = vmatprep.subr.mxu0 0.0
    %1260 = vmatpush1.msra.mxu0 0.0
    %1261 = vmatprep.subr.mxu0 0.0
    %1262 = vmatpush1.msra.mxu0 0.0
    %1263 = vmatprep.mubr.f32.mxu0 0.0
    %1264 = vmatmul.mubr.f32.gmra.mrb[0].mxu0 %v1110
    %v1265 = vpop.f32.mrb[0].mxu0
    %v1266 = vadd.f32 0.0, %v1265
    %v1267 = vpop.f32.mrb[0].mxu0
    %v1268 = vadd.f32 0.0, %v1267
    %1269 = vdwg.mxu0
    %v1270 = vadd.f32 %v1124, %v1195
    %v1271 = vadd.f32 %v1125, %v1197
    %v1272 = vadd.f32 %v1126, %v1266
    %v1273 = vadd.f32 %v1127, %v1268
    %v1274 = vxor.u32 %v1270, 2147483648
    %v1275 = vxor.u32 %v1271, 2147483648
    %v1276 = vxor.u32 %v1272, 2147483648
    %v1277 = vmul.f32 %v1274, 1.442695
    %v1278 = vpow.pop %v1277
    %v1279 = vmul.f32 %v1275, 1.442695
    %v1280 = vpow.pop %v1279
    %v1281 = vmul.f32 %v1276, 1.442695
    %v1282 = vpow.pop %v1281
    %v1283 = vadd.f32 %v1278, 1.0
    %v1284 = vadd.f32 %v1280, 1.0
    %v1285 = vadd.f32 %v1282, 1.0
    %v1286 = vrcp.pop %v1283
    %v1287 = vmul.f32 1.0, %v1286
    %v1288 = vrcp.pop %v1284
    %v1289 = vmul.f32 1.0, %v1288
    %v1290 = vrcp.pop %v1285
    %v1291 = vmul.f32 1.0, %v1290
    %v1292 = vtanh.pop %v1273
    %v1293 = vmul.f32 %v1289, %v1108
    %v1294 = vmul.f32 %v1287, %v1292
    %v1295 = vadd.f32 %v1293, %v1294
    %v1296 = vtanh.pop %v1295
    %v1297 = vmul.f32 %v1291, %v1296
    %s1298 = scalar_lea.vmem %s1, 24
    %v1299 = vld [vmem:[%s1298] sm:$0xff]
    %vm1300 = vcmp.gt.f32.partialorder %v1299, 0.0
    %v1301 = vsel %vm1300, 1, 0
    %1302 = vset.pattern.permute.xlu0 0
    %1303 = vperm.xlu0 %1302, %v1301
    %v1304 = vpop.permute.xlu0 %1303
    %vm1305 = vcmp.eq.s32.totalorder %v1304, 1
    %v1306 = vsel %vm1305, %v1297, 0.0
    %v1307 = vpack.c.bf16 %v1306, %v1306
    %s1308 = scalar_lea.vmem [#allocation5], 12
    %1309 = vst [vmem:[%s1308] sm:$0xf] %v1307
    %s1310 = scalar_lea.vmem [#allocation4], 128
    %v1311 = vld [vmem:[%s1310] sm:$0xff]
    %v1312 = vld [vmem:[%s1310 + $0x8] sm:$0xff]
    %v1313 = vld [vmem:[%s1310 + $0x10] sm:$0xff]
    %v1314 = vld [vmem:[%s1310 + $0x18] sm:$0xff]
    %1315 = vmatprep.subr.mxu0 %v500
    %1316 = vmatpush1.msra.mxu0 %v499
    %1317 = vmatprep.subr.mxu0 %v504
    %1318 = vmatpush1.msra.mxu0 %v503
    %1319 = vmatprep.subr.mxu0 %v508
    %1320 = vmatpush1.msra.mxu0 %v507
    %1321 = vmatprep.subr.mxu0 %v512
    %1322 = vmatpush1.msra.mxu0 %v511
    %1323 = vmatprep.subr.mxu0 %v516
    %1324 = vmatpush1.msra.mxu0 %v515
    %1325 = vmatprep.subr.mxu0 %v520
    %1326 = vmatpush1.msra.mxu0 %v519
    %1327 = vmatprep.subr.mxu0 %v524
    %1328 = vmatpush1.msra.mxu0 %v523
    %1329 = vmatprep.subr.mxu0 %v528
    %1330 = vmatpush1.msra.mxu0 %v527
    %1331 = vmatprep.subr.mxu0 %v532
    %1332 = vmatpush1.msra.mxu0 %v531
    %1333 = vmatprep.subr.mxu0 %v536
    %1334 = vmatpush1.msra.mxu0 %v535
    %1335 = vmatprep.subr.mxu0 %v540
    %1336 = vmatpush1.msra.mxu0 %v539
    %1337 = vmatprep.subr.mxu0 %v544
    %1338 = vmatpush1.msra.mxu0 %v543
    %1339 = vmatprep.subr.mxu0 %v548
    %1340 = vmatpush1.msra.mxu0 %v547
    %1341 = vmatprep.subr.mxu0 %v552
    %1342 = vmatpush1.msra.mxu0 %v551
    %1343 = vmatprep.subr.mxu0 %v556
    %1344 = vmatpush1.msra.mxu0 %v555
    %1345 = vmatprep.subr.mxu0 %v560
    %1346 = vmatpush1.msra.mxu0 %v559
    %1347 = vmatprep.subr.mxu0 0.0
    %1348 = vmatpush1.msra.mxu0 0.0
    %1349 = vmatprep.subr.mxu0 0.0
    %1350 = vmatpush1.msra.mxu0 0.0
    %1351 = vmatprep.subr.mxu0 0.0
    %1352 = vmatpush1.msra.mxu0 0.0
    %1353 = vmatprep.subr.mxu0 0.0
    %1354 = vmatpush1.msra.mxu0 0.0
    %1355 = vmatprep.subr.mxu0 0.0
    %1356 = vmatpush1.msra.mxu0 0.0
    %1357 = vmatprep.subr.mxu0 0.0
    %1358 = vmatpush1.msra.mxu0 0.0
    %1359 = vmatprep.subr.mxu0 0.0
    %1360 = vmatpush1.msra.mxu0 0.0
    %1361 = vmatprep.subr.mxu0 0.0
    %1362 = vmatpush1.msra.mxu0 0.0
    %1363 = vmatprep.subr.mxu0 0.0
    %1364 = vmatpush1.msra.mxu0 0.0
    %1365 = vmatprep.subr.mxu0 0.0
    %1366 = vmatpush1.msra.mxu0 0.0
    %1367 = vmatprep.subr.mxu0 0.0
    %1368 = vmatpush1.msra.mxu0 0.0
    %1369 = vmatprep.subr.mxu0 0.0
    %1370 = vmatpush1.msra.mxu0 0.0
    %1371 = vmatprep.subr.mxu0 0.0
    %1372 = vmatpush1.msra.mxu0 0.0
    %1373 = vmatprep.subr.mxu0 0.0
    %1374 = vmatpush1.msra.mxu0 0.0
    %1375 = vmatprep.subr.mxu0 0.0
    %1376 = vmatpush1.msra.mxu0 0.0
    %1377 = vmatprep.subr.mxu0 0.0
    %1378 = vmatpush1.msra.mxu0 0.0
    %1379 = vmatprep.mubr.f32.mxu0 0.0
    %1380 = vmatmul.mubr.f32.gmra.mrb[0].mxu0 %v1297
    %v1381 = vpop.f32.mrb[0].mxu0
    %v1382 = vadd.f32 0.0, %v1381
    %v1383 = vpop.f32.mrb[0].mxu0
    %v1384 = vadd.f32 0.0, %v1383
    %1385 = vdwg.mxu0
    %1386 = vmatprep.subr.mxu0 %v502
    %1387 = vmatpush1.msra.mxu0 %v501
    %1388 = vmatprep.subr.mxu0 %v506
    %1389 = vmatpush1.msra.mxu0 %v505
    %1390 = vmatprep.subr.mxu0 %v510
    %1391 = vmatpush1.msra.mxu0 %v509
    %1392 = vmatprep.subr.mxu0 %v514
    %1393 = vmatpush1.msra.mxu0 %v513
    %1394 = vmatprep.subr.mxu0 %v518
    %1395 = vmatpush1.msra.mxu0 %v517
    %1396 = vmatprep.subr.mxu0 %v522
    %1397 = vmatpush1.msra.mxu0 %v521
    %1398 = vmatprep.subr.mxu0 %v526
    %1399 = vmatpush1.msra.mxu0 %v525
    %1400 = vmatprep.subr.mxu0 %v530
    %1401 = vmatpush1.msra.mxu0 %v529
    %1402 = vmatprep.subr.mxu0 %v534
    %1403 = vmatpush1.msra.mxu0 %v533
    %1404 = vmatprep.subr.mxu0 %v538
    %1405 = vmatpush1.msra.mxu0 %v537
    %1406 = vmatprep.subr.mxu0 %v542
    %1407 = vmatpush1.msra.mxu0 %v541
    %1408 = vmatprep.subr.mxu0 %v546
    %1409 = vmatpush1.msra.mxu0 %v545
    %1410 = vmatprep.subr.mxu0 %v550
    %1411 = vmatpush1.msra.mxu0 %v549
    %1412 = vmatprep.subr.mxu0 %v554
    %1413 = vmatpush1.msra.mxu0 %v553
    %1414 = vmatprep.subr.mxu0 %v558
    %1415 = vmatpush1.msra.mxu0 %v557
    %1416 = vmatprep.subr.mxu0 %v562
    %1417 = vmatpush1.msra.mxu0 %v561
    %1418 = vmatprep.subr.mxu0 0.0
    %1419 = vmatpush1.msra.mxu0 0.0
    %1420 = vmatprep.subr.mxu0 0.0
    %1421 = vmatpush1.msra.mxu0 0.0
    %1422 = vmatprep.subr.mxu0 0.0
    %1423 = vmatpush1.msra.mxu0 0.0
    %1424 = vmatprep.subr.mxu0 0.0
    %1425 = vmatpush1.msra.mxu0 0.0
    %1426 = vmatprep.subr.mxu0 0.0
    %1427 = vmatpush1.msra.mxu0 0.0
    %1428 = vmatprep.subr.mxu0 0.0
    %1429 = vmatpush1.msra.mxu0 0.0
    %1430 = vmatprep.subr.mxu0 0.0
    %1431 = vmatpush1.msra.mxu0 0.0
    %1432 = vmatprep.subr.mxu0 0.0
    %1433 = vmatpush1.msra.mxu0 0.0
    %1434 = vmatprep.subr.mxu0 0.0
    %1435 = vmatpush1.msra.mxu0 0.0
    %1436 = vmatprep.subr.mxu0 0.0
    %1437 = vmatpush1.msra.mxu0 0.0
    %1438 = vmatprep.subr.mxu0 0.0
    %1439 = vmatpush1.msra.mxu0 0.0
    %1440 = vmatprep.subr.mxu0 0.0
    %1441 = vmatpush1.msra.mxu0 0.0
    %1442 = vmatprep.subr.mxu0 0.0
    %1443 = vmatpush1.msra.mxu0 0.0
    %1444 = vmatprep.subr.mxu0 0.0
    %1445 = vmatpush1.msra.mxu0 0.0
    %1446 = vmatprep.subr.mxu0 0.0
    %1447 = vmatpush1.msra.mxu0 0.0
    %1448 = vmatprep.subr.mxu0 0.0
    %1449 = vmatpush1.msra.mxu0 0.0
    %1450 = vmatprep.mubr.f32.mxu0 0.0
    %1451 = vmatmul.mubr.f32.gmra.mrb[0].mxu0 %v1297
    %v1452 = vpop.f32.mrb[0].mxu0
    %v1453 = vadd.f32 0.0, %v1452
    %v1454 = vpop.f32.mrb[0].mxu0
    %v1455 = vadd.f32 0.0, %v1454
    %1456 = vdwg.mxu0
    %v1457 = vadd.f32 %v1311, %v1382
    %v1458 = vadd.f32 %v1312, %v1384
    %v1459 = vadd.f32 %v1313, %v1453
    %v1460 = vadd.f32 %v1314, %v1455
    %v1461 = vxor.u32 %v1457, 2147483648
    %v1462 = vxor.u32 %v1458, 2147483648
    %v1463 = vxor.u32 %v1459, 2147483648
    %v1464 = vmul.f32 %v1461, 1.442695
    %v1465 = vpow.pop %v1464
    %v1466 = vmul.f32 %v1462, 1.442695
    %v1467 = vpow.pop %v1466
    %v1468 = vmul.f32 %v1463, 1.442695
    %v1469 = vpow.pop %v1468
    %v1470 = vadd.f32 %v1465, 1.0
    %v1471 = vadd.f32 %v1467, 1.0
    %v1472 = vadd.f32 %v1469, 1.0
    %v1473 = vrcp.pop %v1470
    %v1474 = vmul.f32 1.0, %v1473
    %v1475 = vrcp.pop %v1471
    %v1476 = vmul.f32 1.0, %v1475
    %v1477 = vrcp.pop %v1472
    %v1478 = vmul.f32 1.0, %v1477
    %v1479 = vtanh.pop %v1460
    %v1480 = vmul.f32 %v1476, %v1295
    %v1481 = vmul.f32 %v1474, %v1479
    %v1482 = vadd.f32 %v1480, %v1481
    %v1483 = vtanh.pop %v1482
    %v1484 = vmul.f32 %v1478, %v1483
    %s1485 = scalar_lea.vmem %s1, 32
    %v1486 = vld [vmem:[%s1485] sm:$0xff]
    %vm1487 = vcmp.gt.f32.partialorder %v1486, 0.0
    %v1488 = vsel %vm1487, 1, 0
    %1489 = vset.pattern.permute.xlu0 0
    %1490 = vperm.xlu0 %1489, %v1488
    %v1491 = vpop.permute.xlu0 %1490
    %vm1492 = vcmp.eq.s32.totalorder %v1491, 1
    %v1493 = vsel %vm1492, %v1484, 0.0
    %v1494 = vpack.c.bf16 %v1493, %v1493
    %s1495 = scalar_lea.vmem [#allocation5], 16
    %1496 = vst [vmem:[%s1495] sm:$0xf] %v1494
    %s1497 = scalar_lea.vmem [#allocation4], 160
    %v1498 = vld [vmem:[%s1497] sm:$0xff]
    %v1499 = vld [vmem:[%s1497 + $0x8] sm:$0xff]
    %v1500 = vld [vmem:[%s1497 + $0x10] sm:$0xff]
    %v1501 = vld [vmem:[%s1497 + $0x18] sm:$0xff]
    %1502 = vmatprep.subr.mxu0 %v500
    %1503 = vmatpush1.msra.mxu0 %v499
    %1504 = vmatprep.subr.mxu0 %v504
    %1505 = vmatpush1.msra.mxu0 %v503
    %1506 = vmatprep.subr.mxu0 %v508
    %1507 = vmatpush1.msra.mxu0 %v507
    %1508 = vmatprep.subr.mxu0 %v512
    %1509 = vmatpush1.msra.mxu0 %v511
    %1510 = vmatprep.subr.mxu0 %v516
    %1511 = vmatpush1.msra.mxu0 %v515
    %1512 = vmatprep.subr.mxu0 %v520
    %1513 = vmatpush1.msra.mxu0 %v519
    %1514 = vmatprep.subr.mxu0 %v524
    %1515 = vmatpush1.msra.mxu0 %v523
    %1516 = vmatprep.subr.mxu0 %v528
    %1517 = vmatpush1.msra.mxu0 %v527
    %1518 = vmatprep.subr.mxu0 %v532
    %1519 = vmatpush1.msra.mxu0 %v531
    %1520 = vmatprep.subr.mxu0 %v536
    %1521 = vmatpush1.msra.mxu0 %v535
    %1522 = vmatprep.subr.mxu0 %v540
    %1523 = vmatpush1.msra.mxu0 %v539
    %1524 = vmatprep.subr.mxu0 %v544
    %1525 = vmatpush1.msra.mxu0 %v543
    %1526 = vmatprep.subr.mxu0 %v548
    %1527 = vmatpush1.msra.mxu0 %v547
    %1528 = vmatprep.subr.mxu0 %v552
    %1529 = vmatpush1.msra.mxu0 %v551
    %1530 = vmatprep.subr.mxu0 %v556
    %1531 = vmatpush1.msra.mxu0 %v555
    %1532 = vmatprep.subr.mxu0 %v560
    %1533 = vmatpush1.msra.mxu0 %v559
    %1534 = vmatprep.subr.mxu0 0.0
    %1535 = vmatpush1.msra.mxu0 0.0
    %1536 = vmatprep.subr.mxu0 0.0
    %1537 = vmatpush1.msra.mxu0 0.0
    %1538 = vmatprep.subr.mxu0 0.0
    %1539 = vmatpush1.msra.mxu0 0.0
    %1540 = vmatprep.subr.mxu0 0.0
    %1541 = vmatpush1.msra.mxu0 0.0
    %1542 = vmatprep.subr.mxu0 0.0
    %1543 = vmatpush1.msra.mxu0 0.0
    %1544 = vmatprep.subr.mxu0 0.0
    %1545 = vmatpush1.msra.mxu0 0.0
    %1546 = vmatprep.subr.mxu0 0.0
    %1547 = vmatpush1.msra.mxu0 0.0
    %1548 = vmatprep.subr.mxu0 0.0
    %1549 = vmatpush1.msra.mxu0 0.0
    %1550 = vmatprep.subr.mxu0 0.0
    %1551 = vmatpush1.msra.mxu0 0.0
    %1552 = vmatprep.subr.mxu0 0.0
    %1553 = vmatpush1.msra.mxu0 0.0
    %1554 = vmatprep.subr.mxu0 0.0
    %1555 = vmatpush1.msra.mxu0 0.0
    %1556 = vmatprep.subr.mxu0 0.0
    %1557 = vmatpush1.msra.mxu0 0.0
    %1558 = vmatprep.subr.mxu0 0.0
    %1559 = vmatpush1.msra.mxu0 0.0
    %1560 = vmatprep.subr.mxu0 0.0
    %1561 = vmatpush1.msra.mxu0 0.0
    %1562 = vmatprep.subr.mxu0 0.0
    %1563 = vmatpush1.msra.mxu0 0.0
    %1564 = vmatprep.subr.mxu0 0.0
    %1565 = vmatpush1.msra.mxu0 0.0
    %1566 = vmatprep.mubr.f32.mxu0 0.0
    %1567 = vmatmul.mubr.f32.gmra.mrb[0].mxu0 %v1484
    %v1568 = vpop.f32.mrb[0].mxu0
    %v1569 = vadd.f32 0.0, %v1568
    %v1570 = vpop.f32.mrb[0].mxu0
    %v1571 = vadd.f32 0.0, %v1570
    %1572 = vdwg.mxu0
    %1573 = vmatprep.subr.mxu0 %v502
    %1574 = vmatpush1.msra.mxu0 %v501
    %1575 = vmatprep.subr.mxu0 %v506
    %1576 = vmatpush1.msra.mxu0 %v505
    %1577 = vmatprep.subr.mxu0 %v510
    %1578 = vmatpush1.msra.mxu0 %v509
    %1579 = vmatprep.subr.mxu0 %v514
    %1580 = vmatpush1.msra.mxu0 %v513
    %1581 = vmatprep.subr.mxu0 %v518
    %1582 = vmatpush1.msra.mxu0 %v517
    %1583 = vmatprep.subr.mxu0 %v522
    %1584 = vmatpush1.msra.mxu0 %v521
    %1585 = vmatprep.subr.mxu0 %v526
    %1586 = vmatpush1.msra.mxu0 %v525
    %1587 = vmatprep.subr.mxu0 %v530
    %1588 = vmatpush1.msra.mxu0 %v529
    %1589 = vmatprep.subr.mxu0 %v534
    %1590 = vmatpush1.msra.mxu0 %v533
    %1591 = vmatprep.subr.mxu0 %v538
    %1592 = vmatpush1.msra.mxu0 %v537
    %1593 = vmatprep.subr.mxu0 %v542
    %1594 = vmatpush1.msra.mxu0 %v541
    %1595 = vmatprep.subr.mxu0 %v546
    %1596 = vmatpush1.msra.mxu0 %v545
    %1597 = vmatprep.subr.mxu0 %v550
    %1598 = vmatpush1.msra.mxu0 %v549
    %1599 = vmatprep.subr.mxu0 %v554
    %1600 = vmatpush1.msra.mxu0 %v553
    %1601 = vmatprep.subr.mxu0 %v558
    %1602 = vmatpush1.msra.mxu0 %v557
    %1603 = vmatprep.subr.mxu0 %v562
    %1604 = vmatpush1.msra.mxu0 %v561
    %1605 = vmatprep.subr.mxu0 0.0
    %1606 = vmatpush1.msra.mxu0 0.0
    %1607 = vmatprep.subr.mxu0 0.0
    %1608 = vmatpush1.msra.mxu0 0.0
    %1609 = vmatprep.subr.mxu0 0.0
    %1610 = vmatpush1.msra.mxu0 0.0
    %1611 = vmatprep.subr.mxu0 0.0
    %1612 = vmatpush1.msra.mxu0 0.0
    %1613 = vmatprep.subr.mxu0 0.0
    %1614 = vmatpush1.msra.mxu0 0.0
    %1615 = vmatprep.subr.mxu0 0.0
    %1616 = vmatpush1.msra.mxu0 0.0
    %1617 = vmatprep.subr.mxu0 0.0
    %1618 = vmatpush1.msra.mxu0 0.0
    %1619 = vmatprep.subr.mxu0 0.0
    %1620 = vmatpush1.msra.mxu0 0.0
    %1621 = vmatprep.subr.mxu0 0.0
    %1622 = vmatpush1.msra.mxu0 0.0
    %1623 = vmatprep.subr.mxu0 0.0
    %1624 = vmatpush1.msra.mxu0 0.0
    %1625 = vmatprep.subr.mxu0 0.0
    %1626 = vmatpush1.msra.mxu0 0.0
    %1627 = vmatprep.subr.mxu0 0.0
    %1628 = vmatpush1.msra.mxu0 0.0
    %1629 = vmatprep.subr.mxu0 0.0
    %1630 = vmatpush1.msra.mxu0 0.0
    %1631 = vmatprep.subr.mxu0 0.0
    %1632 = vmatpush1.msra.mxu0 0.0
    %1633 = vmatprep.subr.mxu0 0.0
    %1634 = vmatpush1.msra.mxu0 0.0
    %1635 = vmatprep.subr.mxu0 0.0
    %1636 = vmatpush1.msra.mxu0 0.0
    %1637 = vmatprep.mubr.f32.mxu0 0.0
    %1638 = vmatmul.mubr.f32.gmra.mrb[0].mxu0 %v1484
    %v1639 = vpop.f32.mrb[0].mxu0
    %v1640 = vadd.f32 0.0, %v1639
    %v1641 = vpop.f32.mrb[0].mxu0
    %v1642 = vadd.f32 0.0, %v1641
    %1643 = vdwg.mxu0
    %v1644 = vadd.f32 %v1498, %v1569
    %v1645 = vadd.f32 %v1499, %v1571
    %v1646 = vadd.f32 %v1500, %v1640
    %v1647 = vadd.f32 %v1501, %v1642
    %v1648 = vxor.u32 %v1644, 2147483648
    %v1649 = vxor.u32 %v1645, 2147483648
    %v1650 = vxor.u32 %v1646, 2147483648
    %v1651 = vmul.f32 %v1648, 1.442695
    %v1652 = vpow.pop %v1651
    %v1653 = vmul.f32 %v1649, 1.442695
    %v1654 = vpow.pop %v1653
    %v1655 = vmul.f32 %v1650, 1.442695
    %v1656 = vpow.pop %v1655
    %v1657 = vadd.f32 %v1652, 1.0
    %v1658 = vadd.f32 %v1654, 1.0
    %v1659 = vadd.f32 %v1656, 1.0
    %v1660 = vrcp.pop %v1657
    %v1661 = vmul.f32 1.0, %v1660
    %v1662 = vrcp.pop %v1658
    %v1663 = vmul.f32 1.0, %v1662
    %v1664 = vrcp.pop %v1659
    %v1665 = vmul.f32 1.0, %v1664
    %v1666 = vtanh.pop %v1647
    %v1667 = vmul.f32 %v1663, %v1482
    %v1668 = vmul.f32 %v1661, %v1666
    %v1669 = vadd.f32 %v1667, %v1668
    %v1670 = vtanh.pop %v1669
    %v1671 = vmul.f32 %v1665, %v1670
    %s1672 = scalar_lea.vmem %s1, 40
    %v1673 = vld [vmem:[%s1672] sm:$0xff]
    %vm1674 = vcmp.gt.f32.partialorder %v1673, 0.0
    %v1675 = vsel %vm1674, 1, 0
    %1676 = vset.pattern.permute.xlu0 0
    %1677 = vperm.xlu0 %1676, %v1675
    %v1678 = vpop.permute.xlu0 %1677
    %vm1679 = vcmp.eq.s32.totalorder %v1678, 1
    %v1680 = vsel %vm1679, %v1671, 0.0
    %v1681 = vpack.c.bf16 %v1680, %v1680
    %s1682 = scalar_lea.vmem [#allocation5], 20
    %1683 = vst [vmem:[%s1682] sm:$0xf] %v1681
    %s1684 = scalar_lea.vmem [#allocation4], 192
    %v1685 = vld [vmem:[%s1684] sm:$0xff]
    %v1686 = vld [vmem:[%s1684 + $0x8] sm:$0xff]
    %v1687 = vld [vmem:[%s1684 + $0x10] sm:$0xff]
    %v1688 = vld [vmem:[%s1684 + $0x18] sm:$0xff]
    %1689 = vmatprep.subr.mxu0 %v500
    %1690 = vmatpush1.msra.mxu0 %v499
    %1691 = vmatprep.subr.mxu0 %v504
    %1692 = vmatpush1.msra.mxu0 %v503
    %1693 = vmatprep.subr.mxu0 %v508
    %1694 = vmatpush1.msra.mxu0 %v507
    %1695 = vmatprep.subr.mxu0 %v512
    %1696 = vmatpush1.msra.mxu0 %v511
    %1697 = vmatprep.subr.mxu0 %v516
    %1698 = vmatpush1.msra.mxu0 %v515
    %1699 = vmatprep.subr.mxu0 %v520
    %1700 = vmatpush1.msra.mxu0 %v519
    %1701 = vmatprep.subr.mxu0 %v524
    %1702 = vmatpush1.msra.mxu0 %v523
    %1703 = vmatprep.subr.mxu0 %v528
    %1704 = vmatpush1.msra.mxu0 %v527
    %1705 = vmatprep.subr.mxu0 %v532
    %1706 = vmatpush1.msra.mxu0 %v531
    %1707 = vmatprep.subr.mxu0 %v536
    %1708 = vmatpush1.msra.mxu0 %v535
    %1709 = vmatprep.subr.mxu0 %v540
    %1710 = vmatpush1.msra.mxu0 %v539
    %1711 = vmatprep.subr.mxu0 %v544
    %1712 = vmatpush1.msra.mxu0 %v543
    %1713 = vmatprep.subr.mxu0 %v548
    %1714 = vmatpush1.msra.mxu0 %v547
    %1715 = vmatprep.subr.mxu0 %v552
    %1716 = vmatpush1.msra.mxu0 %v551
    %1717 = vmatprep.subr.mxu0 %v556
    %1718 = vmatpush1.msra.mxu0 %v555
    %1719 = vmatprep.subr.mxu0 %v560
    %1720 = vmatpush1.msra.mxu0 %v559
    %1721 = vmatprep.subr.mxu0 0.0
    %1722 = vmatpush1.msra.mxu0 0.0
    %1723 = vmatprep.subr.mxu0 0.0
    %1724 = vmatpush1.msra.mxu0 0.0
    %1725 = vmatprep.subr.mxu0 0.0
    %1726 = vmatpush1.msra.mxu0 0.0
    %1727 = vmatprep.subr.mxu0 0.0
    %1728 = vmatpush1.msra.mxu0 0.0
    %1729 = vmatprep.subr.mxu0 0.0
    %1730 = vmatpush1.msra.mxu0 0.0
    %1731 = vmatprep.subr.mxu0 0.0
    %1732 = vmatpush1.msra.mxu0 0.0
    %1733 = vmatprep.subr.mxu0 0.0
    %1734 = vmatpush1.msra.mxu0 0.0
    %1735 = vmatprep.subr.mxu0 0.0
    %1736 = vmatpush1.msra.mxu0 0.0
    %1737 = vmatprep.subr.mxu0 0.0
    %1738 = vmatpush1.msra.mxu0 0.0
    %1739 = vmatprep.subr.mxu0 0.0
    %1740 = vmatpush1.msra.mxu0 0.0
    %1741 = vmatprep.subr.mxu0 0.0
    %1742 = vmatpush1.msra.mxu0 0.0
    %1743 = vmatprep.subr.mxu0 0.0
    %1744 = vmatpush1.msra.mxu0 0.0
    %1745 = vmatprep.subr.mxu0 0.0
    %1746 = vmatpush1.msra.mxu0 0.0
    %1747 = vmatprep.subr.mxu0 0.0
    %1748 = vmatpush1.msra.mxu0 0.0
    %1749 = vmatprep.subr.mxu0 0.0
    %1750 = vmatpush1.msra.mxu0 0.0
    %1751 = vmatprep.subr.mxu0 0.0
    %1752 = vmatpush1.msra.mxu0 0.0
    %1753 = vmatprep.mubr.f32.mxu0 0.0
    %1754 = vmatmul.mubr.f32.gmra.mrb[0].mxu0 %v1671
    %v1755 = vpop.f32.mrb[0].mxu0
    %v1756 = vadd.f32 0.0, %v1755
    %v1757 = vpop.f32.mrb[0].mxu0
    %v1758 = vadd.f32 0.0, %v1757
    %1759 = vdwg.mxu0
    %1760 = vmatprep.subr.mxu0 %v502
    %1761 = vmatpush1.msra.mxu0 %v501
    %1762 = vmatprep.subr.mxu0 %v506
    %1763 = vmatpush1.msra.mxu0 %v505
    %1764 = vmatprep.subr.mxu0 %v510
    %1765 = vmatpush1.msra.mxu0 %v509
    %1766 = vmatprep.subr.mxu0 %v514
    %1767 = vmatpush1.msra.mxu0 %v513
    %1768 = vmatprep.subr.mxu0 %v518
    %1769 = vmatpush1.msra.mxu0 %v517
    %1770 = vmatprep.subr.mxu0 %v522
    %1771 = vmatpush1.msra.mxu0 %v521
    %1772 = vmatprep.subr.mxu0 %v526
    %1773 = vmatpush1.msra.mxu0 %v525
    %1774 = vmatprep.subr.mxu0 %v530
    %1775 = vmatpush1.msra.mxu0 %v529
    %1776 = vmatprep.subr.mxu0 %v534
    %1777 = vmatpush1.msra.mxu0 %v533
    %1778 = vmatprep.subr.mxu0 %v538
    %1779 = vmatpush1.msra.mxu0 %v537
    %1780 = vmatprep.subr.mxu0 %v542
    %1781 = vmatpush1.msra.mxu0 %v541
    %1782 = vmatprep.subr.mxu0 %v546
    %1783 = vmatpush1.msra.mxu0 %v545
    %1784 = vmatprep.subr.mxu0 %v550
    %1785 = vmatpush1.msra.mxu0 %v549
    %1786 = vmatprep.subr.mxu0 %v554
    %1787 = vmatpush1.msra.mxu0 %v553
    %1788 = vmatprep.subr.mxu0 %v558
    %1789 = vmatpush1.msra.mxu0 %v557
    %1790 = vmatprep.subr.mxu0 %v562
    %1791 = vmatpush1.msra.mxu0 %v561
    %1792 = vmatprep.subr.mxu0 0.0
    %1793 = vmatpush1.msra.mxu0 0.0
    %1794 = vmatprep.subr.mxu0 0.0
    %1795 = vmatpush1.msra.mxu0 0.0
    %1796 = vmatprep.subr.mxu0 0.0
    %1797 = vmatpush1.msra.mxu0 0.0
    %1798 = vmatprep.subr.mxu0 0.0
    %1799 = vmatpush1.msra.mxu0 0.0
    %1800 = vmatprep.subr.mxu0 0.0
    %1801 = vmatpush1.msra.mxu0 0.0
    %1802 = vmatprep.subr.mxu0 0.0
    %1803 = vmatpush1.msra.mxu0 0.0
    %1804 = vmatprep.subr.mxu0 0.0
    %1805 = vmatpush1.msra.mxu0 0.0
    %1806 = vmatprep.subr.mxu0 0.0
    %1807 = vmatpush1.msra.mxu0 0.0
    %1808 = vmatprep.subr.mxu0 0.0
    %1809 = vmatpush1.msra.mxu0 0.0
    %1810 = vmatprep.subr.mxu0 0.0
    %1811 = vmatpush1.msra.mxu0 0.0
    %1812 = vmatprep.subr.mxu0 0.0
    %1813 = vmatpush1.msra.mxu0 0.0
    %1814 = vmatprep.subr.mxu0 0.0
    %1815 = vmatpush1.msra.mxu0 0.0
    %1816 = vmatprep.subr.mxu0 0.0
    %1817 = vmatpush1.msra.mxu0 0.0
    %1818 = vmatprep.subr.mxu0 0.0
    %1819 = vmatpush1.msra.mxu0 0.0
    %1820 = vmatprep.subr.mxu0 0.0
    %1821 = vmatpush1.msra.mxu0 0.0
    %1822 = vmatprep.subr.mxu0 0.0
    %1823 = vmatpush1.msra.mxu0 0.0
    %1824 = vmatprep.mubr.f32.mxu0 0.0
    %1825 = vmatmul.mubr.f32.gmra.mrb[0].mxu0 %v1671
    %v1826 = vpop.f32.mrb[0].mxu0
    %v1827 = vadd.f32 0.0, %v1826
    %v1828 = vpop.f32.mrb[0].mxu0
    %v1829 = vadd.f32 0.0, %v1828
    %1830 = vdwg.mxu0
    %v1831 = vadd.f32 %v1685, %v1756
    %v1832 = vadd.f32 %v1686, %v1758
    %v1833 = vadd.f32 %v1687, %v1827
    %v1834 = vadd.f32 %v1688, %v1829
    %v1835 = vxor.u32 %v1831, 2147483648
    %v1836 = vxor.u32 %v1832, 2147483648
    %v1837 = vxor.u32 %v1833, 2147483648
    %v1838 = vmul.f32 %v1835, 1.442695
    %v1839 = vpow.pop %v1838
    %v1840 = vmul.f32 %v1836, 1.442695
    %v1841 = vpow.pop %v1840
    %v1842 = vmul.f32 %v1837, 1.442695
    %v1843 = vpow.pop %v1842
    %v1844 = vadd.f32 %v1839, 1.0
    %v1845 = vadd.f32 %v1841, 1.0
    %v1846 = vadd.f32 %v1843, 1.0
    %v1847 = vrcp.pop %v1844
    %v1848 = vmul.f32 1.0, %v1847
    %v1849 = vrcp.pop %v1845
    %v1850 = vmul.f32 1.0, %v1849
    %v1851 = vrcp.pop %v1846
    %v1852 = vmul.f32 1.0, %v1851
    %v1853 = vtanh.pop %v1834
    %v1854 = vmul.f32 %v1850, %v1669
    %v1855 = vmul.f32 %v1848, %v1853
    %v1856 = vadd.f32 %v1854, %v1855
    %v1857 = vtanh.pop %v1856
    %v1858 = vmul.f32 %v1852, %v1857
    %s1859 = scalar_lea.vmem %s1, 48
    %v1860 = vld [vmem:[%s1859] sm:$0xff]
    %vm1861 = vcmp.gt.f32.partialorder %v1860, 0.0
    %v1862 = vsel %vm1861, 1, 0
    %1863 = vset.pattern.permute.xlu0 0
    %1864 = vperm.xlu0 %1863, %v1862
    %v1865 = vpop.permute.xlu0 %1864
    %vm1866 = vcmp.eq.s32.totalorder %v1865, 1
    %v1867 = vsel %vm1866, %v1858, 0.0
    %v1868 = vpack.c.bf16 %v1867, %v1867
    %s1869 = scalar_lea.vmem [#allocation5], 24
    %1870 = vst [vmem:[%s1869] sm:$0xf] %v1868
    %s1871 = scalar_lea.vmem [#allocation4], 224
    %v1872 = vld [vmem:[%s1871] sm:$0xff]
    %v1873 = vld [vmem:[%s1871 + $0x8] sm:$0xff]
    %v1874 = vld [vmem:[%s1871 + $0x10] sm:$0xff]
    %v1875 = vld [vmem:[%s1871 + $0x18] sm:$0xff]
    %1876 = vmatprep.subr.mxu0 %v500
    %1877 = vmatpush1.msra.mxu0 %v499
    %1878 = vmatprep.subr.mxu0 %v504
    %1879 = vmatpush1.msra.mxu0 %v503
    %1880 = vmatprep.subr.mxu0 %v508
    %1881 = vmatpush1.msra.mxu0 %v507
    %1882 = vmatprep.subr.mxu0 %v512
    %1883 = vmatpush1.msra.mxu0 %v511
    %1884 = vmatprep.subr.mxu0 %v516
    %1885 = vmatpush1.msra.mxu0 %v515
    %1886 = vmatprep.subr.mxu0 %v520
    %1887 = vmatpush1.msra.mxu0 %v519
    %1888 = vmatprep.subr.mxu0 %v524
    %1889 = vmatpush1.msra.mxu0 %v523
    %1890 = vmatprep.subr.mxu0 %v528
    %1891 = vmatpush1.msra.mxu0 %v527
    %1892 = vmatprep.subr.mxu0 %v532
    %1893 = vmatpush1.msra.mxu0 %v531
    %1894 = vmatprep.subr.mxu0 %v536
    %1895 = vmatpush1.msra.mxu0 %v535
    %1896 = vmatprep.subr.mxu0 %v540
    %1897 = vmatpush1.msra.mxu0 %v539
    %1898 = vmatprep.subr.mxu0 %v544
    %1899 = vmatpush1.msra.mxu0 %v543
    %1900 = vmatprep.subr.mxu0 %v548
    %1901 = vmatpush1.msra.mxu0 %v547
    %1902 = vmatprep.subr.mxu0 %v552
    %1903 = vmatpush1.msra.mxu0 %v551
    %1904 = vmatprep.subr.mxu0 %v556
    %1905 = vmatpush1.msra.mxu0 %v555
    %1906 = vmatprep.subr.mxu0 %v560
    %1907 = vmatpush1.msra.mxu0 %v559
    %1908 = vmatprep.subr.mxu0 0.0
    %1909 = vmatpush1.msra.mxu0 0.0
    %1910 = vmatprep.subr.mxu0 0.0
    %1911 = vmatpush1.msra.mxu0 0.0
    %1912 = vmatprep.subr.mxu0 0.0
    %1913 = vmatpush1.msra.mxu0 0.0
    %1914 = vmatprep.subr.mxu0 0.0
    %1915 = vmatpush1.msra.mxu0 0.0
    %1916 = vmatprep.subr.mxu0 0.0
    %1917 = vmatpush1.msra.mxu0 0.0
    %1918 = vmatprep.subr.mxu0 0.0
    %1919 = vmatpush1.msra.mxu0 0.0
    %1920 = vmatprep.subr.mxu0 0.0
    %1921 = vmatpush1.msra.mxu0 0.0
    %1922 = vmatprep.subr.mxu0 0.0
    %1923 = vmatpush1.msra.mxu0 0.0
    %1924 = vmatprep.subr.mxu0 0.0
    %1925 = vmatpush1.msra.mxu0 0.0
    %1926 = vmatprep.subr.mxu0 0.0
    %1927 = vmatpush1.msra.mxu0 0.0
    %1928 = vmatprep.subr.mxu0 0.0
    %1929 = vmatpush1.msra.mxu0 0.0
    %1930 = vmatprep.subr.mxu0 0.0
    %1931 = vmatpush1.msra.mxu0 0.0
    %1932 = vmatprep.subr.mxu0 0.0
    %1933 = vmatpush1.msra.mxu0 0.0
    %1934 = vmatprep.subr.mxu0 0.0
    %1935 = vmatpush1.msra.mxu0 0.0
    %1936 = vmatprep.subr.mxu0 0.0
    %1937 = vmatpush1.msra.mxu0 0.0
    %1938 = vmatprep.subr.mxu0 0.0
    %1939 = vmatpush1.msra.mxu0 0.0
    %1940 = vmatprep.mubr.f32.mxu0 0.0
    %1941 = vmatmul.mubr.f32.gmra.mrb[0].mxu0 %v1858
    %v1942 = vpop.f32.mrb[0].mxu0
    %v1943 = vadd.f32 0.0, %v1942
    %v1944 = vpop.f32.mrb[0].mxu0
    %v1945 = vadd.f32 0.0, %v1944
    %1946 = vdwg.mxu0
    %1947 = vmatprep.subr.mxu0 %v502
    %1948 = vmatpush1.msra.mxu0 %v501
    %1949 = vmatprep.subr.mxu0 %v506
    %1950 = vmatpush1.msra.mxu0 %v505
    %1951 = vmatprep.subr.mxu0 %v510
    %1952 = vmatpush1.msra.mxu0 %v509
    %1953 = vmatprep.subr.mxu0 %v514
    %1954 = vmatpush1.msra.mxu0 %v513
    %1955 = vmatprep.subr.mxu0 %v518
    %1956 = vmatpush1.msra.mxu0 %v517
    %1957 = vmatprep.subr.mxu0 %v522
    %1958 = vmatpush1.msra.mxu0 %v521
    %1959 = vmatprep.subr.mxu0 %v526
    %1960 = vmatpush1.msra.mxu0 %v525
    %1961 = vmatprep.subr.mxu0 %v530
    %1962 = vmatpush1.msra.mxu0 %v529
    %1963 = vmatprep.subr.mxu0 %v534
    %1964 = vmatpush1.msra.mxu0 %v533
    %1965 = vmatprep.subr.mxu0 %v538
    %1966 = vmatpush1.msra.mxu0 %v537
    %1967 = vmatprep.subr.mxu0 %v542
    %1968 = vmatpush1.msra.mxu0 %v541
    %1969 = vmatprep.subr.mxu0 %v546
    %1970 = vmatpush1.msra.mxu0 %v545
    %1971 = vmatprep.subr.mxu0 %v550
    %1972 = vmatpush1.msra.mxu0 %v549
    %1973 = vmatprep.subr.mxu0 %v554
    %1974 = vmatpush1.msra.mxu0 %v553
    %1975 = vmatprep.subr.mxu0 %v558
    %1976 = vmatpush1.msra.mxu0 %v557
    %1977 = vmatprep.subr.mxu0 %v562
    %1978 = vmatpush1.msra.mxu0 %v561
    %1979 = vmatprep.subr.mxu0 0.0
    %1980 = vmatpush1.msra.mxu0 0.0
    %1981 = vmatprep.subr.mxu0 0.0
    %1982 = vmatpush1.msra.mxu0 0.0
    %1983 = vmatprep.subr.mxu0 0.0
    %1984 = vmatpush1.msra.mxu0 0.0
    %1985 = vmatprep.subr.mxu0 0.0
    %1986 = vmatpush1.msra.mxu0 0.0
    %1987 = vmatprep.subr.mxu0 0.0
    %1988 = vmatpush1.msra.mxu0 0.0
    %1989 = vmatprep.subr.mxu0 0.0
    %1990 = vmatpush1.msra.mxu0 0.0
    %1991 = vmatprep.subr.mxu0 0.0
    %1992 = vmatpush1.msra.mxu0 0.0
    %1993 = vmatprep.subr.mxu0 0.0
    %1994 = vmatpush1.msra.mxu0 0.0
    %1995 = vmatprep.subr.mxu0 0.0
    %1996 = vmatpush1.msra.mxu0 0.0
    %1997 = vmatprep.subr.mxu0 0.0
    %1998 = vmatpush1.msra.mxu0 0.0
    %1999 = vmatprep.subr.mxu0 0.0
    %2000 = vmatpush1.msra.mxu0 0.0
    %2001 = vmatprep.subr.mxu0 0.0
    %2002 = vmatpush1.msra.mxu0 0.0
    %2003 = vmatprep.subr.mxu0 0.0
    %2004 = vmatpush1.msra.mxu0 0.0
    %2005 = vmatprep.subr.mxu0 0.0
    %2006 = vmatpush1.msra.mxu0 0.0
    %2007 = vmatprep.subr.mxu0 0.0
    %2008 = vmatpush1.msra.mxu0 0.0
    %2009 = vmatprep.subr.mxu0 0.0
    %2010 = vmatpush1.msra.mxu0 0.0
    %2011 = vmatprep.mubr.f32.mxu0 0.0
    %2012 = vmatmul.mubr.f32.gmra.mrb[0].mxu0 %v1858
    %v2013 = vpop.f32.mrb[0].mxu0
    %v2014 = vadd.f32 0.0, %v2013
    %v2015 = vpop.f32.mrb[0].mxu0
    %v2016 = vadd.f32 0.0, %v2015
    %2017 = vdwg.mxu0
    %v2018 = vadd.f32 %v1872, %v1943
    %v2019 = vadd.f32 %v1873, %v1945
    %v2020 = vadd.f32 %v1874, %v2014
    %v2021 = vadd.f32 %v1875, %v2016
    %v2022 = vxor.u32 %v2018, 2147483648
    %v2023 = vxor.u32 %v2019, 2147483648
    %v2024 = vxor.u32 %v2020, 2147483648
    %v2025 = vmul.f32 %v2022, 1.442695
    %v2026 = vpow.pop %v2025
    %v2027 = vmul.f32 %v2023, 1.442695
    %v2028 = vpow.pop %v2027
    %v2029 = vmul.f32 %v2024, 1.442695
    %v2030 = vpow.pop %v2029
    %v2031 = vadd.f32 %v2026, 1.0
    %v2032 = vadd.f32 %v2028, 1.0
    %v2033 = vadd.f32 %v2030, 1.0
    %v2034 = vrcp.pop %v2031
    %v2035 = vmul.f32 1.0, %v2034
    %v2036 = vrcp.pop %v2032
    %v2037 = vmul.f32 1.0, %v2036
    %v2038 = vrcp.pop %v2033
    %v2039 = vmul.f32 1.0, %v2038
    %v2040 = vtanh.pop %v2021
    %v2041 = vmul.f32 %v2037, %v1856
    %v2042 = vmul.f32 %v2035, %v2040
    %v2043 = vadd.f32 %v2041, %v2042
    %v2044 = vtanh.pop %v2043
    %v2045 = vmul.f32 %v2039, %v2044
    %s2046 = scalar_lea.vmem %s1, 56
    %v2047 = vld [vmem:[%s2046] sm:$0xff]
    %vm2048 = vcmp.gt.f32.partialorder %v2047, 0.0
    %v2049 = vsel %vm2048, 1, 0
    %2050 = vset.pattern.permute.xlu0 0
    %2051 = vperm.xlu0 %2050, %v2049
    %v2052 = vpop.permute.xlu0 %2051
    %vm2053 = vcmp.eq.s32.totalorder %v2052, 1
    %v2054 = vsel %vm2053, %v2045, 0.0
    %v2055 = vpack.c.bf16 %v2054, %v2054
    %s2056 = scalar_lea.vmem [#allocation5], 28
    %2057 = vst [vmem:[%s2056] sm:$0xf] %v2055
    %2058 = vst [vmem:[#allocation2] sm:$0xff] %v2045
    %2059 = vst [vmem:[#allocation3] sm:$0xff] %v2043
    %v2060 = vld [vmem:[#allocation5] sm:$0xf]
    %v2061 = vld [vmem:[#allocation5 + $0x4] sm:$0xf]
    %v2062 = vld [vmem:[#allocation5 + $0x8] sm:$0xf]
    %v2063 = vld [vmem:[#allocation5 + $0xc] sm:$0xf]
    %v2064 = vld [vmem:[#allocation5 + $0x10] sm:$0xf]
    %v2065 = vld [vmem:[#allocation5 + $0x14] sm:$0xf]
    %v2066 = vld [vmem:[#allocation5 + $0x18] sm:$0xf]
    %v2067 = vld [vmem:[#allocation5 + $0x1c] sm:$0xf]
    %v2068 = vld [vmem:[%s5] sm:$0xf]
    %v2069 = vld [vmem:[%s5 + $0x4] sm:$0xf]
    %v2070 = vld [vmem:[%s5 + $0x8] sm:$0xf]
    %v2071 = vld [vmem:[%s5 + $0xc] sm:$0xf]
    %v2072 = vld [vmem:[%s5 + $0x10] sm:$0xf]
    %v2073 = vld [vmem:[%s5 + $0x14] sm:$0xf]
    %v2074 = vld [vmem:[%s5 + $0x18] sm:$0xf]
    %v2075 = vld [vmem:[%s5 + $0x1c] sm:$0xf]
    %v2076 = vld [vmem:[%s5 + $0x20] sm:$0xf]
    %v2077 = vld [vmem:[%s5 + $0x24] sm:$0xf]
    %v2078 = vld [vmem:[%s5 + $0x28] sm:$0xf]
    %v2079 = vld [vmem:[%s5 + $0x2c] sm:$0xf]
    %v2080 = vld [vmem:[%s5 + $0x30] sm:$0xf]
    %v2081 = vld [vmem:[%s5 + $0x34] sm:$0xf]
    %v2082 = vld [vmem:[%s5 + $0x38] sm:$0xf]
    %v2083 = vld [vmem:[%s5 + $0x3c] sm:$0xf]
    %v2084 = vld [vmem:[%s6] sm:$0x1]
    %v2086 = vlaneseq
    %v2087 = vshrl.u32 %v2086, 7
    %v2088 = vsub.s32 0, %v2087
    %v2089 = vrot.slane %v2084, %v2088
    %v2099 = vunpack.c.l.b16 %v2060
    %v2100 = vunpack.c.l.b16 %v2061
    %v2101 = vunpack.c.l.b16 %v2062
    %v2102 = vunpack.c.l.b16 %v2063
    %v2103 = vunpack.c.l.b16 %v2064
    %v2104 = vunpack.c.l.b16 %v2065
    %v2105 = vunpack.c.l.b16 %v2066
    %v2106 = vunpack.c.l.b16 %v2067
    %v2107 = vpack.c.b16 %v2100, %v2099
    %v2108 = vpack.c.b16 %v2102, %v2101
    %v2109 = vpack.c.b16 %v2104, %v2103
    %v2110 = vpack.c.b16 %v2106, %v2105
    %v2131 = vunpack.c.l.b16 %v2068
    %v2132 = vunpack.c.l.b16 %v2069
    %v2133 = vunpack.c.l.b16 %v2070
    %v2134 = vunpack.c.l.b16 %v2071
    %v2135 = vunpack.c.l.b16 %v2072
    %v2136 = vunpack.c.l.b16 %v2073
    %v2137 = vunpack.c.l.b16 %v2074
    %v2138 = vunpack.c.l.b16 %v2075
    %v2139 = vunpack.c.l.b16 %v2076
    %v2140 = vunpack.c.l.b16 %v2077
    %v2141 = vunpack.c.l.b16 %v2078
    %v2142 = vunpack.c.l.b16 %v2079
    %v2143 = vunpack.c.l.b16 %v2080
    %v2144 = vunpack.c.l.b16 %v2081
    %v2145 = vunpack.c.l.b16 %v2082
    %v2146 = vunpack.c.l.b16 %v2083
    %v2147 = vpack.c.b16 %v2132, %v2131
    %v2148 = vpack.c.b16 %v2134, %v2133
    %v2149 = vpack.c.b16 %v2136, %v2135
    %v2150 = vpack.c.b16 %v2138, %v2137
    %v2151 = vpack.c.b16 %v2140, %v2139
    %v2152 = vpack.c.b16 %v2142, %v2141
    %v2153 = vpack.c.b16 %v2144, %v2143
    %v2154 = vpack.c.b16 %v2146, %v2145
    %2163 = vmatprep.subr.bf16.mxu0 0
    %2164 = vmatpush1.bf16.msra.mxu0 %v2147
    %2165 = vmatprep.subr.bf16.mxu0 0
    %2166 = vmatpush1.bf16.msra.mxu0 %v2148
    %2167 = vmatprep.subr.bf16.mxu0 0
    %2168 = vmatpush1.bf16.msra.mxu0 %v2149
    %2169 = vmatprep.subr.bf16.mxu0 0
    %2170 = vmatpush1.bf16.msra.mxu0 %v2150
    %2171 = vmatprep.subr.bf16.mxu0 0
    %2172 = vmatpush1.bf16.msra.mxu0 %v2151
    %2173 = vmatprep.subr.bf16.mxu0 0
    %2174 = vmatpush1.bf16.msra.mxu0 %v2152
    %2175 = vmatprep.subr.bf16.mxu0 0
    %2176 = vmatpush1.bf16.msra.mxu0 %v2153
    %2177 = vmatprep.subr.bf16.mxu0 0
    %2178 = vmatpush1.bf16.msra.mxu0 %v2154
    %2179 = vmatprep.subr.bf16.mxu0 0
    %2180 = vmatpush1.bf16.msra.mxu0 0
    %2181 = vmatprep.subr.bf16.mxu0 0
    %2182 = vmatpush1.bf16.msra.mxu0 0
    %2183 = vmatprep.subr.bf16.mxu0 0
    %2184 = vmatpush1.bf16.msra.mxu0 0
    %2185 = vmatprep.subr.bf16.mxu0 0
    %2186 = vmatpush1.bf16.msra.mxu0 0
    %2187 = vmatprep.subr.bf16.mxu0 0
    %2188 = vmatpush1.bf16.msra.mxu0 0
    %2189 = vmatprep.subr.bf16.mxu0 0
    %2190 = vmatpush1.bf16.msra.mxu0 0
    %2191 = vmatprep.subr.bf16.mxu0 0
    %2192 = vmatpush1.bf16.msra.mxu0 0
    %2193 = vmatprep.subr.bf16.mxu0 0
    %2194 = vmatpush1.bf16.msra.mxu0 0
    %2195 = vmatprep.mubr.bf16.mxu0 0
    %2196 = vmatmul.mubr.bf16.gmra.mrb[0].mxu0 %v2107
    %v2197 = vpop.f32.mrb[0].mxu0
    %v2198 = vadd.f32 %v2089, %v2197
    %v2199 = vpop.f32.mrb[0].mxu0
    %v2200 = vpop.f32.mrb[0].mxu0
    %v2201 = vadd.f32 %v2089, %v2200
    %v2202 = vpop.f32.mrb[0].mxu0
    %2203 = vmatprep.mubr.bf16.mxu0 0
    %2204 = vmatmul.mubr.bf16.gmra.mrb[0].mxu0 %v2108
    %v2205 = vpop.f32.mrb[0].mxu0
    %v2206 = vadd.f32 %v2089, %v2205
    %v2207 = vpop.f32.mrb[0].mxu0
    %v2208 = vpop.f32.mrb[0].mxu0
    %v2209 = vadd.f32 %v2089, %v2208
    %v2210 = vpop.f32.mrb[0].mxu0
    %2211 = vmatprep.mubr.bf16.mxu0 0
    %2212 = vmatmul.mubr.bf16.gmra.mrb[0].mxu0 %v2109
    %v2213 = vpop.f32.mrb[0].mxu0
    %v2214 = vadd.f32 %v2089, %v2213
    %v2215 = vpop.f32.mrb[0].mxu0
    %v2216 = vpop.f32.mrb[0].mxu0
    %v2217 = vadd.f32 %v2089, %v2216
    %v2218 = vpop.f32.mrb[0].mxu0
    %2219 = vmatprep.mubr.bf16.mxu0 0
    %2220 = vmatmul.mubr.bf16.gmra.mrb[0].mxu0 %v2110
    %v2221 = vpop.f32.mrb[0].mxu0
    %v2222 = vadd.f32 %v2089, %v2221
    %v2223 = vpop.f32.mrb[0].mxu0
    %v2224 = vpop.f32.mrb[0].mxu0
    %v2225 = vadd.f32 %v2089, %v2224
    %v2226 = vpop.f32.mrb[0].mxu0
    %2227 = vdwg.mxu0
    %2228 = vst [vmem:[#allocation12] sm:$0xff] %v2198
    %2229 = vst [vmem:[#allocation12 + $0x8] sm:$0xff] %v2201
    %2230 = vst [vmem:[#allocation12 + $0x10] sm:$0xff] %v2206
    %2231 = vst [vmem:[#allocation12 + $0x18] sm:$0xff] %v2209
    %2232 = vst [vmem:[#allocation12 + $0x20] sm:$0xff] %v2214
    %2233 = vst [vmem:[#allocation12 + $0x28] sm:$0xff] %v2217
    %2234 = vst [vmem:[#allocation12 + $0x30] sm:$0xff] %v2222
    %2235 = vst [vmem:[#allocation12 + $0x38] sm:$0xff] %v2225
    // Predicated region
    $region46: #{tpu_custom_call.1} parent=1 // pred_check
      _
    $region47: #{tpu_custom_call.1} parent=1 // pred_check_branch
      %2237 = sbr.rel (0) target = $region49
    $region48: #{tpu_custom_call.1} parent=1 // pred_region
      %s2239 = ssub.s32 1024, 1024
      %2240 = vsyncadd [#allocation8], %s2239
      %s2241 = sshll.u32 [#allocation12], 4
      %s2242 = int_to_ptr.vmem [resolvable:$true] %s2241
      %2247 = dma.vmem_to_hbm [thread:$0]  %s2242, 1024, %s7, [#allocation8], 128, 128, 8
    $region49: #{tpu_custom_call.1} parent=1 // pred_fallthru
      _
    // Predicated region
    $region50: #{tpu_custom_call.1} parent=1 // pred_check
      _
    $region51: #{tpu_custom_call.1} parent=1 // pred_check_branch
      %2249 = sbr.rel (0) target = $region53
    $region52: #{tpu_custom_call.1} parent=1 // pred_region
      %2250 = dma.done [#allocation8], 1024
    $region53: #{tpu_custom_call.1} parent=1 // pred_fallthru
      _
    %2251 = vsyncpa [#allocation7], 1
    %2252 = vsyncpa [#allocation10], 1
    %2253 = vsyncpa [#allocation8], 1

</llo_original>
